<compile_context>
chip_gen: v6e
topology: v6e:2x2x1
jax: 0.10.0
libtpu: 0.0.40
codegen_flags: <defaults>
</compile_context>

<pallas_src>
import jax
import jax.numpy as jnp
import numpy as np
from jax.experimental import pallas as pl
from jax.experimental.pallas import tpu as pltpu


def _goalnet_kernel(x_ref, wih_ref, whh_ref, b_ref, wfc_ref, bfc_ref,
                    y_ref, hN_ref, cN_ref):
    Bb, T, I = x_ref.shape          # batch-block, seq, input
    H = whh_ref.shape[0]
    O = wfc_ref.shape[1]

    # --- Batched input projection for all timesteps (one MXU pass). -------
    # Bias (b_ih + b_hh) is folded in here, i.e. hoisted out of the loop.
    x_flat = x_ref[...].reshape(Bb * T, I)                       # (Bb*T, I)
    xg = (jnp.dot(x_flat, wih_ref[...],
                  preferred_element_type=jnp.float32)
          + b_ref[...]).reshape(Bb, T, 4 * H)                    # (Bb, T, 4H)

    whh = whh_ref[...]                                           # (H, 4H)

    h = jnp.zeros((Bb, H), jnp.float32)
    c = jnp.zeros((Bb, H), jnp.float32)
    hs = []

    # --- Fully unrolled recurrence; only h @ W_hh + 2 EUP passes are on the
    # serial chain.  No VMEM stores inside the loop. -----------------------
    for t in range(T):                                           # T is static
        gates = xg[:, t, :] + jnp.dot(h, whh,
                                      preferred_element_type=jnp.float32)
        # PyTorch gate order i, f, g, o.  One sigmoid + one tanh over the
        # whole (Bb, 4H) vreg; gates picked with cheap lane slices.
        sg = jax.nn.sigmoid(gates)
        tg = jnp.tanh(gates)
        i_g = sg[:, 0 * H:1 * H]
        f_g = sg[:, 1 * H:2 * H]
        g_g = tg[:, 2 * H:3 * H]
        o_g = sg[:, 3 * H:4 * H]
        c = f_g * c + i_g * g_g
        h = o_g * jnp.tanh(c)
        hs.append(h)                                             # live value

    hN_ref[...] = h
    cN_ref[...] = c

    # --- Dropout (eval) = identity.  Single concat along the untiled axis,
    # one batched fc matmul, one block write (time-major). -----------------
    h_all = jnp.concatenate([ht[None, :, :] for ht in hs], axis=0)  # (T,Bb,H)
    h_all = h_all.reshape(T * Bb, H)                                # (T*Bb,H)
    y = (jnp.dot(h_all, wfc_ref[...],
                 preferred_element_type=jnp.float32)
         + bfc_ref[...])                                            # (T*Bb,O)
    y_ref[...] = y.reshape(T, Bb, O).astype(y_ref.dtype)


def _pick_batch_block(B, T, I, H, O):
    """Batch rows per grid block."""
    # >=2 "parallel" grid blocks (shards across both v7x TensorCores) only when
    # each block still holds whole 8-row sublane groups; otherwise splitting
    # just doubles the serial recurrence work on single-TC chips.
    if B >= 16 and B % 16 == 0:
        b_blk = B // 2
    else:
        b_blk = B

    # Cap per-block VMEM (x/y blocks are double-buffered, plus in-flight
    # values) so the tiling also fits v7x's 64 MiB (32 MiB scoped) VMEM.
    def _block_bytes(bb):
        return 4 * (2 * bb * T * I          # x block, double-buffered
                    + 2 * T * bb * O        # y block, double-buffered
                    + bb * T * 4 * H        # xg
                    + bb * T * H)           # live hidden states

    while b_blk % 16 == 0 and _block_bytes(b_blk) > 24 * (1 << 20):
        b_blk //= 2                         # stays a multiple of 8
    return b_blk


def goalnet_forward(x_btI, params):
    """x_btI: (B, T, I) float32 (batch_first, like PyTorch).
    Returns (y (B, T, O), (h_n (1, B, H), c_n (1, B, H)))."""
    w_ih, w_hh, bias, w_fc, b_fc = (params["w_ih"], params["w_hh"],
                                    params["bias"], params["w_fc"],
                                    params["b_fc"])
    B, T, I = x_btI.shape
    H = w_hh.shape[0]
    O = w_fc.shape[1]

    b_blk = _pick_batch_block(B, T, I, H, O)
    grid = (B // b_blk,)

    y_tbo, h_n, c_n = pl.pallas_call(
        _goalnet_kernel,
        out_shape=(
            jax.ShapeDtypeStruct((T, B, O), jnp.float32),   # time-major y
            jax.ShapeDtypeStruct((B, H), jnp.float32),      # h_n
            jax.ShapeDtypeStruct((B, H), jnp.float32),      # c_n
        ),
        grid=grid,
        in_specs=[
            pl.BlockSpec((b_blk, T, I), lambda b: (b, 0, 0)),   # x (batch_first)
            pl.BlockSpec((I, 4 * H), lambda b: (0, 0)),         # W_ih
            pl.BlockSpec((H, 4 * H), lambda b: (0, 0)),         # W_hh
            pl.BlockSpec((1, 4 * H), lambda b: (0, 0)),         # b_ih + b_hh
            pl.BlockSpec((H, O), lambda b: (0, 0)),             # W_fc
            pl.BlockSpec((1, O), lambda b: (0, 0)),             # b_fc
        ],
        out_specs=(
            pl.BlockSpec((T, b_blk, O), lambda b: (0, b, 0)),   # y (time-major)
            pl.BlockSpec((b_blk, H), lambda b: (b, 0)),         # h_n
            pl.BlockSpec((b_blk, H), lambda b: (b, 0)),         # c_n
        ),
        compiler_params=pltpu.CompilerParams(
            dimension_semantics=("parallel",),                  # batch blocks independent
            vmem_limit_bytes=32 * 1024 * 1024),
    )(x_btI, w_ih, w_hh, bias, w_fc, b_fc)

    y = jnp.transpose(y_tbo, (1, 0, 2))        # (B, T, O); tiny op, outside kernel
    return y, (h_n[None, :, :], c_n[None, :, :])   # (1, B, H) like PyTorch


def _reference_forward(x_btI, params):
    """Pure-JAX reference (lax.scan LSTM) for correctness checking."""
    w_ih, w_hh, bias, w_fc, b_fc = (params["w_ih"], params["w_hh"],
                                    params["bias"], params["w_fc"],
                                    params["b_fc"])
    B = x_btI.shape[0]
    H = w_hh.shape[0]

    def step(carry, x_t):
        h, c = carry
        gates = x_t @ w_ih + h @ w_hh + bias[0]
        i = jax.nn.sigmoid(gates[:, 0 * H:1 * H])
        f = jax.nn.sigmoid(gates[:, 1 * H:2 * H])
        g = jnp.tanh(gates[:, 2 * H:3 * H])
        o = jax.nn.sigmoid(gates[:, 3 * H:4 * H])
        c_new = f * c + i * g
        h_new = o * jnp.tanh(c_new)
        return (h_new, c_new), h_new

    h0 = jnp.zeros((B, H), jnp.float32)
    c0 = jnp.zeros((B, H), jnp.float32)
    (h_n, c_n), hs = jax.lax.scan(step, (h0, c0),
                                  jnp.transpose(x_btI, (1, 0, 2)))
    y = jnp.transpose(hs, (1, 0, 2)) @ w_fc + b_fc[0]
    return y, (h_n[None], c_n[None])


def init_params(key, input_size, hidden_size, output_size):
    """Deterministic init mimicking PyTorch's U(-1/sqrt(H), 1/sqrt(H))."""
    k = 1.0 / np.sqrt(hidden_size)
    ks = jax.random.split(key, 6)
    # Stored pre-transposed as (in_features, 4H) / (H, O) for x @ W use.
    w_ih = jax.random.uniform(ks[0], (input_size, 4 * hidden_size),
                              jnp.float32, -k, k)
    w_hh = jax.random.uniform(ks[1], (hidden_size, 4 * hidden_size),
                              jnp.float32, -k, k)
    b_ih = jax.random.uniform(ks[2], (4 * hidden_size,), jnp.float32, -k, k)
    b_hh = jax.random.uniform(ks[3], (4 * hidden_size,), jnp.float32, -k, k)
    kf = 1.0 / np.sqrt(hidden_size)
    w_fc = jax.random.uniform(ks[4], (hidden_size, output_size),
                              jnp.float32, -kf, kf)
    b_fc = jax.random.uniform(ks[5], (output_size,), jnp.float32, -kf, kf)
    return {
        "w_ih": w_ih,
        "w_hh": w_hh,
        "bias": (b_ih + b_hh)[None, :],   # fold the two LSTM biases, keep 2D
        "w_fc": w_fc,
        "b_fc": b_fc[None, :],
    }


if __name__ == "__main__":
    INPUT_SIZE, HIDDEN_SIZE, OUTPUT_SIZE = 16, 32, 8
    BATCH, SEQ = 2, 8

    key = jax.random.PRNGKey(0)
    kx, kp = jax.random.split(key)
    x = jax.random.normal(kx, (BATCH, SEQ, INPUT_SIZE), jnp.float32)
    params = init_params(kp, INPUT_SIZE, HIDDEN_SIZE, OUTPUT_SIZE)

    y, (h_n, c_n) = jax.jit(goalnet_forward)(x, params)
    jax.block_until_ready((y, h_n, c_n))

    y_ref, (h_ref, c_ref) = _reference_forward(x, params)
    np.testing.assert_allclose(np.asarray(y), np.asarray(y_ref),
                               rtol=1e-4, atol=1e-4)
    np.testing.assert_allclose(np.asarray(h_n), np.asarray(h_ref),
                               rtol=1e-4, atol=1e-4)
    np.testing.assert_allclose(np.asarray(c_n), np.asarray(c_ref),
                               rtol=1e-4, atol=1e-4)

    assert y.shape == (BATCH, SEQ, OUTPUT_SIZE)
    assert h_n.shape == (1, BATCH, HIDDEN_SIZE)
    assert c_n.shape == (1, BATCH, HIDDEN_SIZE)
    print("KERNEL_OK")
</pallas_src>

<mosaic_0001>
module attributes {stable_mosaic.version = 11 : i64} {
  func.func @_goalnet_kernel(%arg0: i32, %arg1: memref<2x8x16xf32, #tpu.memory_space<vmem>>, %arg2: memref<16x128xf32, #tpu.memory_space<vmem>>, %arg3: memref<32x128xf32, #tpu.memory_space<vmem>>, %arg4: memref<1x128xf32, #tpu.memory_space<vmem>>, %arg5: memref<32x8xf32, #tpu.memory_space<vmem>>, %arg6: memref<1x8xf32, #tpu.memory_space<vmem>>, %arg7: memref<8x2x8xf32, #tpu.memory_space<vmem>>, %arg8: memref<2x32xf32, #tpu.memory_space<vmem>>, %arg9: memref<2x32xf32, #tpu.memory_space<vmem>>) attributes {dimension_semantics = [#tpu.dimension_semantics<parallel>], iteration_bounds = array<i64: 1>, scalar_prefetch = 0 : i64, scratch_operands = 0 : i64, tpu.core_type = #tpu.core_type<tc>, window_params = [{transform_indices = @transform_0, window_bounds = array<i64: 2, 8, 16>}, {pipeline_mode = #tpu.pipeline_mode<synchronous>, transform_indices = @transform_1, window_bounds = array<i64: 16, 128>}, {pipeline_mode = #tpu.pipeline_mode<synchronous>, transform_indices = @transform_2, window_bounds = array<i64: 32, 128>}, {pipeline_mode = #tpu.pipeline_mode<synchronous>, transform_indices = @transform_3, window_bounds = array<i64: 1, 128>}, {pipeline_mode = #tpu.pipeline_mode<synchronous>, transform_indices = @transform_4, window_bounds = array<i64: 32, 8>}, {pipeline_mode = #tpu.pipeline_mode<synchronous>, transform_indices = @transform_5, window_bounds = array<i64: 1, 8>}, {transform_indices = @transform_6, window_bounds = array<i64: 8, 2, 8>}, {transform_indices = @transform_7, window_bounds = array<i64: 2, 32>}, {transform_indices = @transform_8, window_bounds = array<i64: 2, 32>}]} {
    %c0 = arith.constant 0 : index
    %c0_0 = arith.constant 0 : index
    %c0_1 = arith.constant 0 : index
    %0 = vector.load %arg1[%c0, %c0_0, %c0_1] : memref<2x8x16xf32, #tpu.memory_space<vmem>>, vector<2x8x16xf32>
    %1 = vector.shape_cast %0 : vector<2x8x16xf32> to vector<16x16xf32>
    %c0_2 = arith.constant 0 : index
    %c0_3 = arith.constant 0 : index
    %2 = vector.load %arg2[%c0_2, %c0_3] : memref<16x128xf32, #tpu.memory_space<vmem>>, vector<16x128xf32>
    %cst = arith.constant dense<0.000000e+00> : vector<16x128xf32>
    %3 = tpu.matmul %1, %2, %cst {dimension_numbers = #tpu.dot_dimension_numbers<[1], [0], [0], [1], [0, 0, 1, 1], [], []>} : vector<16x16xf32>, vector<16x128xf32>, vector<16x128xf32> -> vector<16x128xf32>
    %c0_4 = arith.constant 0 : index
    %c0_5 = arith.constant 0 : index
    %4 = vector.load %arg4[%c0_4, %c0_5] : memref<1x128xf32, #tpu.memory_space<vmem>>, vector<1x128xf32>
    %5 = vector.broadcast %4 : vector<1x128xf32> to vector<16x128xf32>
    %6 = arith.addf %3, %5 : vector<16x128xf32>
    %7 = vector.shape_cast %6 : vector<16x128xf32> to vector<2x8x128xf32>
    %c0_6 = arith.constant 0 : index
    %c0_7 = arith.constant 0 : index
    %8 = vector.load %arg3[%c0_6, %c0_7] : memref<32x128xf32, #tpu.memory_space<vmem>>, vector<32x128xf32>
    %cst_8 = arith.constant 0.000000e+00 : f32
    %9 = vector.broadcast %cst_8 : f32 to vector<2x32xf32>
    %cst_9 = arith.constant 0.000000e+00 : f32
    %10 = vector.broadcast %cst_9 : f32 to vector<2x32xf32>
    %11 = vector.extract_strided_slice %7 {offsets = [0, 0, 0], sizes = [2, 1, 128], strides = [1, 1, 1]} : vector<2x8x128xf32> to vector<2x1x128xf32>
    %12 = vector.shape_cast %11 : vector<2x1x128xf32> to vector<2x128xf32>
    %cst_10 = arith.constant dense<0.000000e+00> : vector<2x128xf32>
    %13 = tpu.matmul %9, %8, %cst_10 {dimension_numbers = #tpu.dot_dimension_numbers<[1], [0], [0], [1], [0, 0, 1, 1], [], []>} : vector<2x32xf32>, vector<32x128xf32>, vector<2x128xf32> -> vector<2x128xf32>
    %14 = arith.addf %12, %13 : vector<2x128xf32>
    %15 = arith.negf %14 : vector<2x128xf32>
    %16 = math.exp %15 : vector<2x128xf32>
    %cst_11 = arith.constant 1.000000e+00 : f32
    %17 = vector.broadcast %cst_11 : f32 to vector<2x128xf32>
    %18 = arith.addf %17, %16 : vector<2x128xf32>
    %19 = arith.divf %17, %18 : vector<2x128xf32>
    %20 = math.tanh %14 : vector<2x128xf32>
    %21 = vector.extract_strided_slice %19 {offsets = [0, 0], sizes = [2, 32], strides = [1, 1]} : vector<2x128xf32> to vector<2x32xf32>
    %22 = vector.extract_strided_slice %19 {offsets = [0, 32], sizes = [2, 32], strides = [1, 1]} : vector<2x128xf32> to vector<2x32xf32>
    %23 = vector.extract_strided_slice %20 {offsets = [0, 64], sizes = [2, 32], strides = [1, 1]} : vector<2x128xf32> to vector<2x32xf32>
    %24 = vector.extract_strided_slice %19 {offsets = [0, 96], sizes = [2, 32], strides = [1, 1]} : vector<2x128xf32> to vector<2x32xf32>
    %25 = arith.mulf %22, %10 : vector<2x32xf32>
    %26 = arith.mulf %21, %23 : vector<2x32xf32>
    %27 = arith.addf %25, %26 : vector<2x32xf32>
    %28 = math.tanh %27 : vector<2x32xf32>
    %29 = arith.mulf %24, %28 : vector<2x32xf32>
    %30 = vector.extract_strided_slice %7 {offsets = [0, 1, 0], sizes = [2, 1, 128], strides = [1, 1, 1]} : vector<2x8x128xf32> to vector<2x1x128xf32>
    %31 = vector.shape_cast %30 : vector<2x1x128xf32> to vector<2x128xf32>
    %cst_12 = arith.constant dense<0.000000e+00> : vector<2x128xf32>
    %32 = tpu.matmul %29, %8, %cst_12 {dimension_numbers = #tpu.dot_dimension_numbers<[1], [0], [0], [1], [0, 0, 1, 1], [], []>} : vector<2x32xf32>, vector<32x128xf32>, vector<2x128xf32> -> vector<2x128xf32>
    %33 = arith.addf %31, %32 : vector<2x128xf32>
    %34 = arith.negf %33 : vector<2x128xf32>
    %35 = math.exp %34 : vector<2x128xf32>
    %cst_13 = arith.constant 1.000000e+00 : f32
    %36 = vector.broadcast %cst_13 : f32 to vector<2x128xf32>
    %37 = arith.addf %36, %35 : vector<2x128xf32>
    %38 = arith.divf %36, %37 : vector<2x128xf32>
    %39 = math.tanh %33 : vector<2x128xf32>
    %40 = vector.extract_strided_slice %38 {offsets = [0, 0], sizes = [2, 32], strides = [1, 1]} : vector<2x128xf32> to vector<2x32xf32>
    %41 = vector.extract_strided_slice %38 {offsets = [0, 32], sizes = [2, 32], strides = [1, 1]} : vector<2x128xf32> to vector<2x32xf32>
    %42 = vector.extract_strided_slice %39 {offsets = [0, 64], sizes = [2, 32], strides = [1, 1]} : vector<2x128xf32> to vector<2x32xf32>
    %43 = vector.extract_strided_slice %38 {offsets = [0, 96], sizes = [2, 32], strides = [1, 1]} : vector<2x128xf32> to vector<2x32xf32>
    %44 = arith.mulf %41, %27 : vector<2x32xf32>
    %45 = arith.mulf %40, %42 : vector<2x32xf32>
    %46 = arith.addf %44, %45 : vector<2x32xf32>
    %47 = math.tanh %46 : vector<2x32xf32>
    %48 = arith.mulf %43, %47 : vector<2x32xf32>
    %49 = vector.extract_strided_slice %7 {offsets = [0, 2, 0], sizes = [2, 1, 128], strides = [1, 1, 1]} : vector<2x8x128xf32> to vector<2x1x128xf32>
    %50 = vector.shape_cast %49 : vector<2x1x128xf32> to vector<2x128xf32>
    %cst_14 = arith.constant dense<0.000000e+00> : vector<2x128xf32>
    %51 = tpu.matmul %48, %8, %cst_14 {dimension_numbers = #tpu.dot_dimension_numbers<[1], [0], [0], [1], [0, 0, 1, 1], [], []>} : vector<2x32xf32>, vector<32x128xf32>, vector<2x128xf32> -> vector<2x128xf32>
    %52 = arith.addf %50, %51 : vector<2x128xf32>
    %53 = arith.negf %52 : vector<2x128xf32>
    %54 = math.exp %53 : vector<2x128xf32>
    %cst_15 = arith.constant 1.000000e+00 : f32
    %55 = vector.broadcast %cst_15 : f32 to vector<2x128xf32>
    %56 = arith.addf %55, %54 : vector<2x128xf32>
    %57 = arith.divf %55, %56 : vector<2x128xf32>
    %58 = math.tanh %52 : vector<2x128xf32>
    %59 = vector.extract_strided_slice %57 {offsets = [0, 0], sizes = [2, 32], strides = [1, 1]} : vector<2x128xf32> to vector<2x32xf32>
    %60 = vector.extract_strided_slice %57 {offsets = [0, 32], sizes = [2, 32], strides = [1, 1]} : vector<2x128xf32> to vector<2x32xf32>
    %61 = vector.extract_strided_slice %58 {offsets = [0, 64], sizes = [2, 32], strides = [1, 1]} : vector<2x128xf32> to vector<2x32xf32>
    %62 = vector.extract_strided_slice %57 {offsets = [0, 96], sizes = [2, 32], strides = [1, 1]} : vector<2x128xf32> to vector<2x32xf32>
    %63 = arith.mulf %60, %46 : vector<2x32xf32>
    %64 = arith.mulf %59, %61 : vector<2x32xf32>
    %65 = arith.addf %63, %64 : vector<2x32xf32>
    %66 = math.tanh %65 : vector<2x32xf32>
    %67 = arith.mulf %62, %66 : vector<2x32xf32>
    %68 = vector.extract_strided_slice %7 {offsets = [0, 3, 0], sizes = [2, 1, 128], strides = [1, 1, 1]} : vector<2x8x128xf32> to vector<2x1x128xf32>
    %69 = vector.shape_cast %68 : vector<2x1x128xf32> to vector<2x128xf32>
    %cst_16 = arith.constant dense<0.000000e+00> : vector<2x128xf32>
    %70 = tpu.matmul %67, %8, %cst_16 {dimension_numbers = #tpu.dot_dimension_numbers<[1], [0], [0], [1], [0, 0, 1, 1], [], []>} : vector<2x32xf32>, vector<32x128xf32>, vector<2x128xf32> -> vector<2x128xf32>
    %71 = arith.addf %69, %70 : vector<2x128xf32>
    %72 = arith.negf %71 : vector<2x128xf32>
    %73 = math.exp %72 : vector<2x128xf32>
    %cst_17 = arith.constant 1.000000e+00 : f32
    %74 = vector.broadcast %cst_17 : f32 to vector<2x128xf32>
    %75 = arith.addf %74, %73 : vector<2x128xf32>
    %76 = arith.divf %74, %75 : vector<2x128xf32>
    %77 = math.tanh %71 : vector<2x128xf32>
    %78 = vector.extract_strided_slice %76 {offsets = [0, 0], sizes = [2, 32], strides = [1, 1]} : vector<2x128xf32> to vector<2x32xf32>
    %79 = vector.extract_strided_slice %76 {offsets = [0, 32], sizes = [2, 32], strides = [1, 1]} : vector<2x128xf32> to vector<2x32xf32>
    %80 = vector.extract_strided_slice %77 {offsets = [0, 64], sizes = [2, 32], strides = [1, 1]} : vector<2x128xf32> to vector<2x32xf32>
    %81 = vector.extract_strided_slice %76 {offsets = [0, 96], sizes = [2, 32], strides = [1, 1]} : vector<2x128xf32> to vector<2x32xf32>
    %82 = arith.mulf %79, %65 : vector<2x32xf32>
    %83 = arith.mulf %78, %80 : vector<2x32xf32>
    %84 = arith.addf %82, %83 : vector<2x32xf32>
    %85 = math.tanh %84 : vector<2x32xf32>
    %86 = arith.mulf %81, %85 : vector<2x32xf32>
    %87 = vector.extract_strided_slice %7 {offsets = [0, 4, 0], sizes = [2, 1, 128], strides = [1, 1, 1]} : vector<2x8x128xf32> to vector<2x1x128xf32>
    %88 = vector.shape_cast %87 : vector<2x1x128xf32> to vector<2x128xf32>
    %cst_18 = arith.constant dense<0.000000e+00> : vector<2x128xf32>
    %89 = tpu.matmul %86, %8, %cst_18 {dimension_numbers = #tpu.dot_dimension_numbers<[1], [0], [0], [1], [0, 0, 1, 1], [], []>} : vector<2x32xf32>, vector<32x128xf32>, vector<2x128xf32> -> vector<2x128xf32>
    %90 = arith.addf %88, %89 : vector<2x128xf32>
    %91 = arith.negf %90 : vector<2x128xf32>
    %92 = math.exp %91 : vector<2x128xf32>
    %cst_19 = arith.constant 1.000000e+00 : f32
    %93 = vector.broadcast %cst_19 : f32 to vector<2x128xf32>
    %94 = arith.addf %93, %92 : vector<2x128xf32>
    %95 = arith.divf %93, %94 : vector<2x128xf32>
    %96 = math.tanh %90 : vector<2x128xf32>
    %97 = vector.extract_strided_slice %95 {offsets = [0, 0], sizes = [2, 32], strides = [1, 1]} : vector<2x128xf32> to vector<2x32xf32>
    %98 = vector.extract_strided_slice %95 {offsets = [0, 32], sizes = [2, 32], strides = [1, 1]} : vector<2x128xf32> to vector<2x32xf32>
    %99 = vector.extract_strided_slice %96 {offsets = [0, 64], sizes = [2, 32], strides = [1, 1]} : vector<2x128xf32> to vector<2x32xf32>
    %100 = vector.extract_strided_slice %95 {offsets = [0, 96], sizes = [2, 32], strides = [1, 1]} : vector<2x128xf32> to vector<2x32xf32>
    %101 = arith.mulf %98, %84 : vector<2x32xf32>
    %102 = arith.mulf %97, %99 : vector<2x32xf32>
    %103 = arith.addf %101, %102 : vector<2x32xf32>
    %104 = math.tanh %103 : vector<2x32xf32>
    %105 = arith.mulf %100, %104 : vector<2x32xf32>
    %106 = vector.extract_strided_slice %7 {offsets = [0, 5, 0], sizes = [2, 1, 128], strides = [1, 1, 1]} : vector<2x8x128xf32> to vector<2x1x128xf32>
    %107 = vector.shape_cast %106 : vector<2x1x128xf32> to vector<2x128xf32>
    %cst_20 = arith.constant dense<0.000000e+00> : vector<2x128xf32>
    %108 = tpu.matmul %105, %8, %cst_20 {dimension_numbers = #tpu.dot_dimension_numbers<[1], [0], [0], [1], [0, 0, 1, 1], [], []>} : vector<2x32xf32>, vector<32x128xf32>, vector<2x128xf32> -> vector<2x128xf32>
    %109 = arith.addf %107, %108 : vector<2x128xf32>
    %110 = arith.negf %109 : vector<2x128xf32>
    %111 = math.exp %110 : vector<2x128xf32>
    %cst_21 = arith.constant 1.000000e+00 : f32
    %112 = vector.broadcast %cst_21 : f32 to vector<2x128xf32>
    %113 = arith.addf %112, %111 : vector<2x128xf32>
    %114 = arith.divf %112, %113 : vector<2x128xf32>
    %115 = math.tanh %109 : vector<2x128xf32>
    %116 = vector.extract_strided_slice %114 {offsets = [0, 0], sizes = [2, 32], strides = [1, 1]} : vector<2x128xf32> to vector<2x32xf32>
    %117 = vector.extract_strided_slice %114 {offsets = [0, 32], sizes = [2, 32], strides = [1, 1]} : vector<2x128xf32> to vector<2x32xf32>
    %118 = vector.extract_strided_slice %115 {offsets = [0, 64], sizes = [2, 32], strides = [1, 1]} : vector<2x128xf32> to vector<2x32xf32>
    %119 = vector.extract_strided_slice %114 {offsets = [0, 96], sizes = [2, 32], strides = [1, 1]} : vector<2x128xf32> to vector<2x32xf32>
    %120 = arith.mulf %117, %103 : vector<2x32xf32>
    %121 = arith.mulf %116, %118 : vector<2x32xf32>
    %122 = arith.addf %120, %121 : vector<2x32xf32>
    %123 = math.tanh %122 : vector<2x32xf32>
    %124 = arith.mulf %119, %123 : vector<2x32xf32>
    %125 = vector.extract_strided_slice %7 {offsets = [0, 6, 0], sizes = [2, 1, 128], strides = [1, 1, 1]} : vector<2x8x128xf32> to vector<2x1x128xf32>
    %126 = vector.shape_cast %125 : vector<2x1x128xf32> to vector<2x128xf32>
    %cst_22 = arith.constant dense<0.000000e+00> : vector<2x128xf32>
    %127 = tpu.matmul %124, %8, %cst_22 {dimension_numbers = #tpu.dot_dimension_numbers<[1], [0], [0], [1], [0, 0, 1, 1], [], []>} : vector<2x32xf32>, vector<32x128xf32>, vector<2x128xf32> -> vector<2x128xf32>
    %128 = arith.addf %126, %127 : vector<2x128xf32>
    %129 = arith.negf %128 : vector<2x128xf32>
    %130 = math.exp %129 : vector<2x128xf32>
    %cst_23 = arith.constant 1.000000e+00 : f32
    %131 = vector.broadcast %cst_23 : f32 to vector<2x128xf32>
    %132 = arith.addf %131, %130 : vector<2x128xf32>
    %133 = arith.divf %131, %132 : vector<2x128xf32>
    %134 = math.tanh %128 : vector<2x128xf32>
    %135 = vector.extract_strided_slice %133 {offsets = [0, 0], sizes = [2, 32], strides = [1, 1]} : vector<2x128xf32> to vector<2x32xf32>
    %136 = vector.extract_strided_slice %133 {offsets = [0, 32], sizes = [2, 32], strides = [1, 1]} : vector<2x128xf32> to vector<2x32xf32>
    %137 = vector.extract_strided_slice %134 {offsets = [0, 64], sizes = [2, 32], strides = [1, 1]} : vector<2x128xf32> to vector<2x32xf32>
    %138 = vector.extract_strided_slice %133 {offsets = [0, 96], sizes = [2, 32], strides = [1, 1]} : vector<2x128xf32> to vector<2x32xf32>
    %139 = arith.mulf %136, %122 : vector<2x32xf32>
    %140 = arith.mulf %135, %137 : vector<2x32xf32>
    %141 = arith.addf %139, %140 : vector<2x32xf32>
    %142 = math.tanh %141 : vector<2x32xf32>
    %143 = arith.mulf %138, %142 : vector<2x32xf32>
    %144 = vector.extract_strided_slice %7 {offsets = [0, 7, 0], sizes = [2, 1, 128], strides = [1, 1, 1]} : vector<2x8x128xf32> to vector<2x1x128xf32>
    %145 = vector.shape_cast %144 : vector<2x1x128xf32> to vector<2x128xf32>
    %cst_24 = arith.constant dense<0.000000e+00> : vector<2x128xf32>
    %146 = tpu.matmul %143, %8, %cst_24 {dimension_numbers = #tpu.dot_dimension_numbers<[1], [0], [0], [1], [0, 0, 1, 1], [], []>} : vector<2x32xf32>, vector<32x128xf32>, vector<2x128xf32> -> vector<2x128xf32>
    %147 = arith.addf %145, %146 : vector<2x128xf32>
    %148 = arith.negf %147 : vector<2x128xf32>
    %149 = math.exp %148 : vector<2x128xf32>
    %cst_25 = arith.constant 1.000000e+00 : f32
    %150 = vector.broadcast %cst_25 : f32 to vector<2x128xf32>
    %151 = arith.addf %150, %149 : vector<2x128xf32>
    %152 = arith.divf %150, %151 : vector<2x128xf32>
    %153 = math.tanh %147 : vector<2x128xf32>
    %154 = vector.extract_strided_slice %152 {offsets = [0, 0], sizes = [2, 32], strides = [1, 1]} : vector<2x128xf32> to vector<2x32xf32>
    %155 = vector.extract_strided_slice %152 {offsets = [0, 32], sizes = [2, 32], strides = [1, 1]} : vector<2x128xf32> to vector<2x32xf32>
    %156 = vector.extract_strided_slice %153 {offsets = [0, 64], sizes = [2, 32], strides = [1, 1]} : vector<2x128xf32> to vector<2x32xf32>
    %157 = vector.extract_strided_slice %152 {offsets = [0, 96], sizes = [2, 32], strides = [1, 1]} : vector<2x128xf32> to vector<2x32xf32>
    %158 = arith.mulf %155, %141 : vector<2x32xf32>
    %159 = arith.mulf %154, %156 : vector<2x32xf32>
    %160 = arith.addf %158, %159 : vector<2x32xf32>
    %161 = math.tanh %160 : vector<2x32xf32>
    %162 = arith.mulf %157, %161 : vector<2x32xf32>
    %c0_26 = arith.constant 0 : index
    %c0_27 = arith.constant 0 : index
    %163 = vector.load %arg8[%c0_26, %c0_27] : memref<2x32xf32, #tpu.memory_space<vmem>>, vector<2x32xf32>
    tpu.vector_store %arg8[%c0_26, %c0_27], %162 {strides = array<i32>} : memref<2x32xf32, #tpu.memory_space<vmem>>, vector<2x32xf32>,
    %c0_28 = arith.constant 0 : index
    %c0_29 = arith.constant 0 : index
    %164 = vector.load %arg9[%c0_28, %c0_29] : memref<2x32xf32, #tpu.memory_space<vmem>>, vector<2x32xf32>
    tpu.vector_store %arg9[%c0_28, %c0_29], %160 {strides = array<i32>} : memref<2x32xf32, #tpu.memory_space<vmem>>, vector<2x32xf32>,
    %165 = vector.shape_cast %29 : vector<2x32xf32> to vector<1x2x32xf32>
    %166 = vector.shape_cast %48 : vector<2x32xf32> to vector<1x2x32xf32>
    %167 = vector.shape_cast %67 : vector<2x32xf32> to vector<1x2x32xf32>
    %168 = vector.shape_cast %86 : vector<2x32xf32> to vector<1x2x32xf32>
    %169 = vector.shape_cast %105 : vector<2x32xf32> to vector<1x2x32xf32>
    %170 = vector.shape_cast %124 : vector<2x32xf32> to vector<1x2x32xf32>
    %171 = vector.shape_cast %143 : vector<2x32xf32> to vector<1x2x32xf32>
    %172 = vector.shape_cast %162 : vector<2x32xf32> to vector<1x2x32xf32>
    %173 = tpu.concatenate %165, %166, %167, %168, %169, %170, %171, %172 in 0 : vector<1x2x32xf32>, vector<1x2x32xf32>, vector<1x2x32xf32>, vector<1x2x32xf32>, vector<1x2x32xf32>, vector<1x2x32xf32>, vector<1x2x32xf32>, vector<1x2x32xf32> -> vector<8x2x32xf32>
    %174 = vector.shape_cast %173 : vector<8x2x32xf32> to vector<16x32xf32>
    %c0_30 = arith.constant 0 : index
    %c0_31 = arith.constant 0 : index
    %175 = vector.load %arg5[%c0_30, %c0_31] : memref<32x8xf32, #tpu.memory_space<vmem>>, vector<32x8xf32>
    %cst_32 = arith.constant dense<0.000000e+00> : vector<16x8xf32>
    %176 = tpu.matmul %174, %175, %cst_32 {dimension_numbers = #tpu.dot_dimension_numbers<[1], [0], [0], [1], [0, 0, 1, 1], [], []>} : vector<16x32xf32>, vector<32x8xf32>, vector<16x8xf32> -> vector<16x8xf32>
    %c0_33 = arith.constant 0 : index
    %c0_34 = arith.constant 0 : index
    %177 = vector.load %arg6[%c0_33, %c0_34] : memref<1x8xf32, #tpu.memory_space<vmem>>, vector<1x8xf32>
    %178 = vector.broadcast %177 : vector<1x8xf32> to vector<16x8xf32>
    %179 = arith.addf %176, %178 : vector<16x8xf32>
    %180 = vector.shape_cast %179 : vector<16x8xf32> to vector<8x2x8xf32>
    %c0_35 = arith.constant 0 : index
    %c0_36 = arith.constant 0 : index
    %c0_37 = arith.constant 0 : index
    %181 = vector.load %arg7[%c0_35, %c0_36, %c0_37] : memref<8x2x8xf32, #tpu.memory_space<vmem>>, vector<8x2x8xf32>
    tpu.vector_store %arg7[%c0_35, %c0_36, %c0_37], %180 {strides = array<i32>} : memref<8x2x8xf32, #tpu.memory_space<vmem>>, vector<8x2x8xf32>,
    return
  }
  func.func @transform_0(%arg0: i32) -> (i32, i32, i32) {
    %c0_i32 = arith.constant 0 : i32
    %c0_i32_0 = arith.constant 0 : i32
    %c0_i32_1 = arith.constant 0 : i32
    return %arg0, %c0_i32, %c0_i32_0 : i32, i32, i32
  }
  func.func @transform_1(%arg0: i32) -> (i32, i32) {
    %c0_i32 = arith.constant 0 : i32
    %c0_i32_0 = arith.constant 0 : i32
    %c0_i32_1 = arith.constant 0 : i32
    return %c0_i32, %c0_i32_0 : i32, i32
  }
  func.func @transform_2(%arg0: i32) -> (i32, i32) {
    %c0_i32 = arith.constant 0 : i32
    %c0_i32_0 = arith.constant 0 : i32
    %c0_i32_1 = arith.constant 0 : i32
    return %c0_i32, %c0_i32_0 : i32, i32
  }
  func.func @transform_3(%arg0: i32) -> (i32, i32) {
    %c0_i32 = arith.constant 0 : i32
    %c0_i32_0 = arith.constant 0 : i32
    %c0_i32_1 = arith.constant 0 : i32
    return %c0_i32, %c0_i32_0 : i32, i32
  }
  func.func @transform_4(%arg0: i32) -> (i32, i32) {
    %c0_i32 = arith.constant 0 : i32
    %c0_i32_0 = arith.constant 0 : i32
    %c0_i32_1 = arith.constant 0 : i32
    return %c0_i32, %c0_i32_0 : i32, i32
  }
  func.func @transform_5(%arg0: i32) -> (i32, i32) {
    %c0_i32 = arith.constant 0 : i32
    %c0_i32_0 = arith.constant 0 : i32
    %c0_i32_1 = arith.constant 0 : i32
    return %c0_i32, %c0_i32_0 : i32, i32
  }
  func.func @transform_6(%arg0: i32) -> (i32, i32, i32) {
    %c0_i32 = arith.constant 0 : i32
    %c0_i32_0 = arith.constant 0 : i32
    %c0_i32_1 = arith.constant 0 : i32
    return %c0_i32, %arg0, %c0_i32_0 : i32, i32, i32
  }
  func.func @transform_7(%arg0: i32) -> (i32, i32) {
    %c0_i32 = arith.constant 0 : i32
    %c0_i32_0 = arith.constant 0 : i32
    return %arg0, %c0_i32 : i32, i32
  }
  func.func @transform_8(%arg0: i32) -> (i32, i32) {
    %c0_i32 = arith.constant 0 : i32
    %c0_i32_0 = arith.constant 0 : i32
    return %arg0, %c0_i32 : i32, i32
  }
}

</mosaic_0001>

<llo_original>
// kernel: goalnet_forward.1
$region0: #{goalnet_forward.1}
  #allocation0 [shape = 'u32[]', space=smem, size = 0x4, offset = 0x4, fixed_abs, tag = 'smem constant byte address 0x4 - core index']
  #allocation1 [shape = 'u32[144,128]{1,0:T(1,128)}', space=vmem, size = 0x12000, scoped, tag = 'internal scratch']
  %s0 = inlined_call_operand.hbm [shape: f32[2,8,16], index: 0, kind: input, shape index: {}]
  %s1 = inlined_call_operand.vmem [shape: f32[16,128], index: 1, kind: input, shape index: {}]
  %s2 = inlined_call_operand.vmem [shape: f32[32,128], index: 2, kind: input, shape index: {}]
  %s3 = inlined_call_operand.vmem [shape: f32[1,128], index: 3, kind: input, shape index: {}]
  %s4 = inlined_call_operand.vmem [shape: f32[32,8], index: 4, kind: input, shape index: {}]
  %s5 = inlined_call_operand.hbm [shape: f32[1,8], index: 5, kind: input, shape index: {}]
  %s6 = inlined_call_operand.vmem [shape: f32[8,2,8], index: 6, kind: output, shape index: {0}]
  %s7 = inlined_call_operand.hbm [shape: f32[2,32], index: 7, kind: output, shape index: {1}]
  %s8 = inlined_call_operand.hbm [shape: f32[2,32], index: 8, kind: output, shape index: {2}]
  %9 = xla_tuple %s6, %s7, %s8
  %s10 = sld [smem:[#allocation0]]
  $region58: #{goalnet_forward.1} parent=0
    _
  %s12 = ssub.s32 1, %s10
  %s13 = scalar_select 0, %s12, %s10
  $region1: #{goalnet_forward.1} parent=0
    #allocation2 [shape = 'u8[8192]{0}', space=vmem, size = 0x2000, scoped, tag = 'input window, operand 0, single buffered']
    #allocation3 [shape = 's32[1]{0}', space=sflag, size = 0x4, scoped, tag = 'scoped memory for goalnet_forward.1']
    #allocation4 [shape = 's32[1]{0}', space=sflag, size = 0x4, scoped, tag = 'scoped memory for goalnet_forward.1']
    #allocation5 [shape = 'u8[512]{0}', space=vmem, size = 0x400, scoped, tag = 'input window, operand 5, single buffered']
    #allocation6 [shape = 's32[1]{0}', space=sflag, size = 0x4, scoped, tag = 'scoped memory for goalnet_forward.1']
    #allocation7 [shape = 'u8[1024]{0}', space=vmem, size = 0x400, scoped, tag = 'output window, operand 1, single buffered']
    #allocation8 [shape = 'u8[1024]{0}', space=vmem, size = 0x400, scoped, tag = 'output window, operand 2, single buffered']
    #allocation9 [shape = 's32[1]{0}', space=sflag, size = 0x4, scoped, tag = 'scoped memory for goalnet_forward.1']
    %14 = vsyncpa [#allocation3], 0
    %15 = vsyncpa [#allocation6], 0
    %16 = vsyncpa [#allocation4], 0
    %17 = vsyncpa [#allocation9], 0
    // Predicated region
    $region2: #{goalnet_forward.1} parent=1 // pred_check
      _
    $region3: #{goalnet_forward.1} parent=1 // pred_check_branch
      %19 = sbr.rel (0) target = $region5
    $region4: #{goalnet_forward.1} parent=1 // pred_region
      %s21 = ssub.s32 256, 256
      %22 = vsyncadd [#allocation3], %s21
      %s23 = sshll.u32 [#allocation2], 4
      %s24 = int_to_ptr.vmem [resolvable:$true] %s23
      %29 = dma.hbm_to_vmem [thread:$0]  %s0, 256, %s24, [#allocation3], 128, 128, 8
    $region5: #{goalnet_forward.1} parent=1 // pred_fallthru
      _
    // Predicated region
    $region6: #{goalnet_forward.1} parent=1 // pred_check
      _
    $region7: #{goalnet_forward.1} parent=1 // pred_check_branch
      %31 = sbr.rel (0) target = $region9
    $region8: #{goalnet_forward.1} parent=1 // pred_region
      _
    $region9: #{goalnet_forward.1} parent=1 // pred_fallthru
      _
    // Predicated region
    $region10: #{goalnet_forward.1} parent=1 // pred_check
      _
    $region11: #{goalnet_forward.1} parent=1 // pred_check_branch
      %33 = sbr.rel (0) target = $region13
    $region12: #{goalnet_forward.1} parent=1 // pred_region
      _
    $region13: #{goalnet_forward.1} parent=1 // pred_fallthru
      _
    // Predicated region
    $region14: #{goalnet_forward.1} parent=1 // pred_check
      _
    $region15: #{goalnet_forward.1} parent=1 // pred_check_branch
      %35 = sbr.rel (0) target = $region17
    $region16: #{goalnet_forward.1} parent=1 // pred_region
      _
    $region17: #{goalnet_forward.1} parent=1 // pred_fallthru
      _
    // Predicated region
    $region18: #{goalnet_forward.1} parent=1 // pred_check
      _
    $region19: #{goalnet_forward.1} parent=1 // pred_check_branch
      %37 = sbr.rel (0) target = $region21
    $region20: #{goalnet_forward.1} parent=1 // pred_region
      _
    $region21: #{goalnet_forward.1} parent=1 // pred_fallthru
      _
    // Predicated region
    $region22: #{goalnet_forward.1} parent=1 // pred_check
      _
    $region23: #{goalnet_forward.1} parent=1 // pred_check_branch
      %39 = sbr.rel (0) target = $region25
    $region24: #{goalnet_forward.1} parent=1 // pred_region
      %s41 = ssub.s32 16, 16
      %42 = vsyncadd [#allocation6], %s41
      %s44 = sshll.u32 [#allocation5], 4
      %s45 = int_to_ptr.vmem [resolvable:$true] %s44
      %47 = dma.hbm_to_vmem [thread:$0]  %s5, 16, %s45, [#allocation6]
    $region25: #{goalnet_forward.1} parent=1 // pred_fallthru
      _
    // Predicated region
    $region26: #{goalnet_forward.1} parent=1 // pred_check
      _
    $region27: #{goalnet_forward.1} parent=1 // pred_check_branch
      %49 = sbr.rel (0) target = $region29
    $region28: #{goalnet_forward.1} parent=1 // pred_region
      %50 = dma.done [#allocation3], 256
    $region29: #{goalnet_forward.1} parent=1 // pred_fallthru
      _
    // Predicated region
    $region30: #{goalnet_forward.1} parent=1 // pred_check
      _
    $region31: #{goalnet_forward.1} parent=1 // pred_check_branch
      %52 = sbr.rel (0) target = $region33
    $region32: #{goalnet_forward.1} parent=1 // pred_region
      %53 = dma.done [#allocation6], 16
    $region33: #{goalnet_forward.1} parent=1 // pred_fallthru
      _
    %v54 = vld [vmem:[#allocation2] sm:$0xff]
    %v55 = vld [vmem:[#allocation2 + $0x8] sm:$0xff]
    %v56 = vld [vmem:[%s1] sm:$0xff]
    %v57 = vld [vmem:[%s1 + $0x8] sm:$0xff]
    %v58 = vld [vmem:[%s3] sm:$0x1]
    %v60 = vlaneseq
    %v61 = vshrl.u32 %v60, 7
    %v62 = vsub.s32 0, %v61
    %v63 = vrot.slane %v58, %v62
    %vm65 = vcmask 130048
    %v67 = vsel %vm65, %v54, 0
    %v70 = vsel %vm65, %v55, 0
    %72 = vmatprep.subr.mxu0 0.0
    %73 = vmatpush1.msra.mxu0 0.0
    %74 = vmatprep.subr.mxu0 0.0
    %75 = vmatpush1.msra.mxu0 0.0
    %76 = vmatprep.subr.mxu0 0.0
    %77 = vmatpush1.msra.mxu0 0.0
    %78 = vmatprep.subr.mxu0 0.0
    %79 = vmatpush1.msra.mxu0 0.0
    %80 = vmatprep.subr.mxu0 0.0
    %81 = vmatpush1.msra.mxu0 0.0
    %82 = vmatprep.subr.mxu0 0.0
    %83 = vmatpush1.msra.mxu0 0.0
    %84 = vmatprep.subr.mxu0 0.0
    %85 = vmatpush1.msra.mxu0 0.0
    %86 = vmatprep.subr.mxu0 0.0
    %87 = vmatpush1.msra.mxu0 0.0
    %88 = vmatprep.subr.mxu0 0.0
    %89 = vmatpush1.msra.mxu0 0.0
    %90 = vmatprep.subr.mxu0 0.0
    %91 = vmatpush1.msra.mxu0 0.0
    %92 = vmatprep.subr.mxu0 0.0
    %93 = vmatpush1.msra.mxu0 0.0
    %94 = vmatprep.subr.mxu0 0.0
    %95 = vmatpush1.msra.mxu0 0.0
    %96 = vmatprep.subr.mxu0 0.0
    %97 = vmatpush1.msra.mxu0 0.0
    %98 = vmatprep.subr.mxu0 0.0
    %99 = vmatpush1.msra.mxu0 0.0
    %100 = vmatprep.subr.mxu0 0.0
    %101 = vmatpush1.msra.mxu0 %v57
    %102 = vmatprep.subr.mxu0 0.0
    %103 = vmatpush1.msra.mxu0 %v56
    %104 = vmatprep.subr.mxu0 0.0
    %105 = vmatpush2.msra.mxu0 0.0
    %106 = vmatprep.subr.mxu0 0.0
    %107 = vmatpush2.msra.mxu0 0.0
    %108 = vmatprep.subr.mxu0 0.0
    %109 = vmatpush2.msra.mxu0 0.0
    %110 = vmatprep.subr.mxu0 0.0
    %111 = vmatpush2.msra.mxu0 0.0
    %112 = vmatprep.subr.mxu0 0.0
    %113 = vmatpush2.msra.mxu0 0.0
    %114 = vmatprep.subr.mxu0 0.0
    %115 = vmatpush2.msra.mxu0 0.0
    %116 = vmatprep.subr.mxu0 0.0
    %117 = vmatpush2.msra.mxu0 0.0
    %118 = vmatprep.subr.mxu0 0.0
    %119 = vmatpush2.msra.mxu0 0.0
    %120 = vmatprep.subr.mxu0 0.0
    %121 = vmatpush2.msra.mxu0 0.0
    %122 = vmatprep.subr.mxu0 0.0
    %123 = vmatpush2.msra.mxu0 0.0
    %124 = vmatprep.subr.mxu0 0.0
    %125 = vmatpush2.msra.mxu0 0.0
    %126 = vmatprep.subr.mxu0 0.0
    %127 = vmatpush2.msra.mxu0 0.0
    %128 = vmatprep.subr.mxu0 0.0
    %129 = vmatpush2.msra.mxu0 0.0
    %130 = vmatprep.subr.mxu0 0.0
    %131 = vmatpush2.msra.mxu0 0.0
    %132 = vmatprep.subr.mxu0 0.0
    %133 = vmatpush2.msra.mxu0 0.0
    %134 = vmatprep.subr.mxu0 0.0
    %135 = vmatpush2.msra.mxu0 0.0
    %136 = vmatprep.mubr.f32.mxu0 0.0
    %137 = vmatmul.mubr.f32.gmra.mxu0 %v67
    %v138 = vpop.f32.mrf.mxu0
    %v139 = vadd.f32 %v63, %v138
    %v140 = vpop.f32.mrf.mxu0
    %141 = vmatprep.mubr.f32.mxu0 0.0
    %142 = vmatmul.mubr.f32.gmra.mxu0 %v70
    %v143 = vpop.f32.mrf.mxu0
    %v144 = vadd.f32 %v63, %v143
    %v145 = vpop.f32.mrf.mxu0
    %146 = vdwg.mxu0
    %v147 = vld [vmem:[%s2] sm:$0xff]
    %v148 = vld [vmem:[%s2 + $0x8] sm:$0xff]
    %v149 = vld [vmem:[%s2 + $0x10] sm:$0xff]
    %v150 = vld [vmem:[%s2 + $0x18] sm:$0xff]
    %vm151 = vcmask 261120
    %v153 = vsel %vm151, 0.0, 0
    %155 = vmatprep.subr.mxu0 0.0
    %156 = vmatpush1.msra.mxu0 0.0
    %157 = vmatprep.subr.mxu0 0.0
    %158 = vmatpush1.msra.mxu0 0.0
    %159 = vmatprep.subr.mxu0 0.0
    %160 = vmatpush1.msra.mxu0 0.0
    %161 = vmatprep.subr.mxu0 0.0
    %162 = vmatpush1.msra.mxu0 0.0
    %163 = vmatprep.subr.mxu0 0.0
    %164 = vmatpush1.msra.mxu0 0.0
    %165 = vmatprep.subr.mxu0 0.0
    %166 = vmatpush1.msra.mxu0 0.0
    %167 = vmatprep.subr.mxu0 0.0
    %168 = vmatpush1.msra.mxu0 0.0
    %169 = vmatprep.subr.mxu0 0.0
    %170 = vmatpush1.msra.mxu0 0.0
    %171 = vmatprep.subr.mxu0 0.0
    %172 = vmatpush1.msra.mxu0 0.0
    %173 = vmatprep.subr.mxu0 0.0
    %174 = vmatpush1.msra.mxu0 0.0
    %175 = vmatprep.subr.mxu0 0.0
    %176 = vmatpush1.msra.mxu0 0.0
    %177 = vmatprep.subr.mxu0 0.0
    %178 = vmatpush1.msra.mxu0 0.0
    %179 = vmatprep.subr.mxu0 0.0
    %180 = vmatpush1.msra.mxu0 %v150
    %181 = vmatprep.subr.mxu0 0.0
    %182 = vmatpush1.msra.mxu0 %v149
    %183 = vmatprep.subr.mxu0 0.0
    %184 = vmatpush1.msra.mxu0 %v148
    %185 = vmatprep.subr.mxu0 0.0
    %186 = vmatpush1.msra.mxu0 %v147
    %187 = vmatprep.subr.mxu0 0.0
    %188 = vmatpush2.msra.mxu0 0.0
    %189 = vmatprep.subr.mxu0 0.0
    %190 = vmatpush2.msra.mxu0 0.0
    %191 = vmatprep.subr.mxu0 0.0
    %192 = vmatpush2.msra.mxu0 0.0
    %193 = vmatprep.subr.mxu0 0.0
    %194 = vmatpush2.msra.mxu0 0.0
    %195 = vmatprep.subr.mxu0 0.0
    %196 = vmatpush2.msra.mxu0 0.0
    %197 = vmatprep.subr.mxu0 0.0
    %198 = vmatpush2.msra.mxu0 0.0
    %199 = vmatprep.subr.mxu0 0.0
    %200 = vmatpush2.msra.mxu0 0.0
    %201 = vmatprep.subr.mxu0 0.0
    %202 = vmatpush2.msra.mxu0 0.0
    %203 = vmatprep.subr.mxu0 0.0
    %204 = vmatpush2.msra.mxu0 0.0
    %205 = vmatprep.subr.mxu0 0.0
    %206 = vmatpush2.msra.mxu0 0.0
    %207 = vmatprep.subr.mxu0 0.0
    %208 = vmatpush2.msra.mxu0 0.0
    %209 = vmatprep.subr.mxu0 0.0
    %210 = vmatpush2.msra.mxu0 0.0
    %211 = vmatprep.subr.mxu0 0.0
    %212 = vmatpush2.msra.mxu0 0.0
    %213 = vmatprep.subr.mxu0 0.0
    %214 = vmatpush2.msra.mxu0 0.0
    %215 = vmatprep.subr.mxu0 0.0
    %216 = vmatpush2.msra.mxu0 0.0
    %217 = vmatprep.subr.mxu0 0.0
    %218 = vmatpush2.msra.mxu0 0.0
    %219 = vmatprep.mubr.f32.mxu0 0.0
    %220 = vmatmul.mubr.f32.gmra.mxu0 %v153
    %v221 = vpop.f32.mrf.mxu0
    %v222 = vadd.f32 0.0, %v221
    %v223 = vpop.f32.mrf.mxu0
    %224 = vdwg.mxu0
    %v226 = vrot.slane %v222, 1
    %v229 = vadd.f32 %v139, %v222
    %v230 = vadd.f32 %v144, %v226
    %v231 = vxor.u32 %v229, 2147483648
    %v232 = vxor.u32 %v230, 2147483648
    %v233 = vmul.f32 %v231, 1.442695
    %v234 = vpow.pop %v233
    %v235 = vmul.f32 %v232, 1.442695
    %v236 = vpow.pop %v235
    %v237 = vadd.f32 %v234, 1.0
    %v238 = vadd.f32 %v236, 1.0
    %v239 = vrcp.pop %v237
    %v240 = vmul.f32 1.0, %v239
    %v241 = vrcp.pop %v238
    %v242 = vmul.f32 1.0, %v241
    %v243 = vtanh.pop %v229
    %v244 = vtanh.pop %v230
    %v245 = vmul.f32 %v240, 0.0
    %v246 = vmul.f32 %v242, 0.0
    %249 = vrot.lane.b32.xlu0 %v243, 64
    %v250 = vpop.permute.xlu0 %249
    %251 = vrot.lane.b32.xlu0 %v244, 64
    %v252 = vpop.permute.xlu0 %251
    %v255 = vmul.f32 %v240, %v250
    %v256 = vmul.f32 %v242, %v252
    %259 = vrot.lane.b32.xlu0 %v255, 32
    %v260 = vpop.permute.xlu0 %259
    %261 = vrot.lane.b32.xlu0 %v256, 32
    %v262 = vpop.permute.xlu0 %261
    %v265 = vadd.f32 %v245, %v260
    %v266 = vadd.f32 %v246, %v262
    %v267 = vtanh.pop %v265
    %v268 = vtanh.pop %v266
    %271 = vrot.lane.b32.xlu0 %v267, 64
    %v272 = vpop.permute.xlu0 %271
    %273 = vrot.lane.b32.xlu0 %v268, 64
    %v274 = vpop.permute.xlu0 %273
    %v277 = vmul.f32 %v240, %v272
    %v278 = vmul.f32 %v242, %v274
    %v281 = vrot.slane %v278, 7
    %vm282 = vcmask 1041409
    %v283 = vsel %vm282, %v281, %v277
    %284 = vrot.lane.b32.xlu0 %v283, 32
    %v285 = vpop.permute.xlu0 %284
    %v286 = vsel %vm151, %v285, 0
    %288 = vmatprep.subr.mxu0 0.0
    %289 = vmatpush1.msra.mxu0 0.0
    %290 = vmatprep.subr.mxu0 0.0
    %291 = vmatpush1.msra.mxu0 0.0
    %292 = vmatprep.subr.mxu0 0.0
    %293 = vmatpush1.msra.mxu0 0.0
    %294 = vmatprep.subr.mxu0 0.0
    %295 = vmatpush1.msra.mxu0 0.0
    %296 = vmatprep.subr.mxu0 0.0
    %297 = vmatpush1.msra.mxu0 0.0
    %298 = vmatprep.subr.mxu0 0.0
    %299 = vmatpush1.msra.mxu0 0.0
    %300 = vmatprep.subr.mxu0 0.0
    %301 = vmatpush1.msra.mxu0 0.0
    %302 = vmatprep.subr.mxu0 0.0
    %303 = vmatpush1.msra.mxu0 0.0
    %304 = vmatprep.subr.mxu0 0.0
    %305 = vmatpush1.msra.mxu0 0.0
    %306 = vmatprep.subr.mxu0 0.0
    %307 = vmatpush1.msra.mxu0 0.0
    %308 = vmatprep.subr.mxu0 0.0
    %309 = vmatpush1.msra.mxu0 0.0
    %310 = vmatprep.subr.mxu0 0.0
    %311 = vmatpush1.msra.mxu0 0.0
    %312 = vmatprep.subr.mxu0 0.0
    %313 = vmatpush1.msra.mxu0 %v150
    %314 = vmatprep.subr.mxu0 0.0
    %315 = vmatpush1.msra.mxu0 %v149
    %316 = vmatprep.subr.mxu0 0.0
    %317 = vmatpush1.msra.mxu0 %v148
    %318 = vmatprep.subr.mxu0 0.0
    %319 = vmatpush1.msra.mxu0 %v147
    %320 = vmatprep.subr.mxu0 0.0
    %321 = vmatpush2.msra.mxu0 0.0
    %322 = vmatprep.subr.mxu0 0.0
    %323 = vmatpush2.msra.mxu0 0.0
    %324 = vmatprep.subr.mxu0 0.0
    %325 = vmatpush2.msra.mxu0 0.0
    %326 = vmatprep.subr.mxu0 0.0
    %327 = vmatpush2.msra.mxu0 0.0
    %328 = vmatprep.subr.mxu0 0.0
    %329 = vmatpush2.msra.mxu0 0.0
    %330 = vmatprep.subr.mxu0 0.0
    %331 = vmatpush2.msra.mxu0 0.0
    %332 = vmatprep.subr.mxu0 0.0
    %333 = vmatpush2.msra.mxu0 0.0
    %334 = vmatprep.subr.mxu0 0.0
    %335 = vmatpush2.msra.mxu0 0.0
    %336 = vmatprep.subr.mxu0 0.0
    %337 = vmatpush2.msra.mxu0 0.0
    %338 = vmatprep.subr.mxu0 0.0
    %339 = vmatpush2.msra.mxu0 0.0
    %340 = vmatprep.subr.mxu0 0.0
    %341 = vmatpush2.msra.mxu0 0.0
    %342 = vmatprep.subr.mxu0 0.0
    %343 = vmatpush2.msra.mxu0 0.0
    %344 = vmatprep.subr.mxu0 0.0
    %345 = vmatpush2.msra.mxu0 0.0
    %346 = vmatprep.subr.mxu0 0.0
    %347 = vmatpush2.msra.mxu0 0.0
    %348 = vmatprep.subr.mxu0 0.0
    %349 = vmatpush2.msra.mxu0 0.0
    %350 = vmatprep.subr.mxu0 0.0
    %351 = vmatpush2.msra.mxu0 0.0
    %352 = vmatprep.mubr.f32.mxu0 0.0
    %353 = vmatmul.mubr.f32.gmra.mxu0 %v286
    %v354 = vpop.f32.mrf.mxu0
    %v355 = vadd.f32 0.0, %v354
    %v356 = vpop.f32.mrf.mxu0
    %357 = vdwg.mxu0
    %v359 = vrot.slane %v355, 7
    %v362 = vadd.f32 %v139, %v359
    %v363 = vadd.f32 %v144, %v355
    %v364 = vxor.u32 %v362, 2147483648
    %v365 = vxor.u32 %v363, 2147483648
    %v366 = vmul.f32 %v364, 1.442695
    %v367 = vpow.pop %v366
    %v368 = vmul.f32 %v365, 1.442695
    %v369 = vpow.pop %v368
    %v370 = vadd.f32 %v367, 1.0
    %v371 = vadd.f32 %v369, 1.0
    %v372 = vrcp.pop %v370
    %v373 = vmul.f32 1.0, %v372
    %v374 = vrcp.pop %v371
    %v375 = vmul.f32 1.0, %v374
    %v376 = vtanh.pop %v362
    %v377 = vtanh.pop %v363
    %v380 = vrot.slane %v265, 7
    %v381 = vrot.slane %v266, 7
    %v384 = vmul.f32 %v373, %v380
    %v385 = vmul.f32 %v375, %v381
    %388 = vrot.lane.b32.xlu0 %v376, 64
    %v389 = vpop.permute.xlu0 %388
    %390 = vrot.lane.b32.xlu0 %v377, 64
    %v391 = vpop.permute.xlu0 %390
    %v394 = vmul.f32 %v373, %v389
    %v395 = vmul.f32 %v375, %v391
    %398 = vrot.lane.b32.xlu0 %v394, 32
    %v399 = vpop.permute.xlu0 %398
    %400 = vrot.lane.b32.xlu0 %v395, 32
    %v401 = vpop.permute.xlu0 %400
    %v404 = vadd.f32 %v384, %v399
    %v405 = vadd.f32 %v385, %v401
    %v406 = vtanh.pop %v404
    %v407 = vtanh.pop %v405
    %410 = vrot.lane.b32.xlu0 %v406, 64
    %v411 = vpop.permute.xlu0 %410
    %412 = vrot.lane.b32.xlu0 %v407, 64
    %v413 = vpop.permute.xlu0 %412
    %v416 = vmul.f32 %v373, %v411
    %v417 = vmul.f32 %v375, %v413
    %v420 = vrot.slane %v416, 1
    %v421 = vsel %vm282, %v417, %v420
    %422 = vrot.lane.b32.xlu0 %v421, 32
    %v423 = vpop.permute.xlu0 %422
    %v424 = vsel %vm151, %v423, 0
    %426 = vmatprep.subr.mxu0 0.0
    %427 = vmatpush1.msra.mxu0 0.0
    %428 = vmatprep.subr.mxu0 0.0
    %429 = vmatpush1.msra.mxu0 0.0
    %430 = vmatprep.subr.mxu0 0.0
    %431 = vmatpush1.msra.mxu0 0.0
    %432 = vmatprep.subr.mxu0 0.0
    %433 = vmatpush1.msra.mxu0 0.0
    %434 = vmatprep.subr.mxu0 0.0
    %435 = vmatpush1.msra.mxu0 0.0
    %436 = vmatprep.subr.mxu0 0.0
    %437 = vmatpush1.msra.mxu0 0.0
    %438 = vmatprep.subr.mxu0 0.0
    %439 = vmatpush1.msra.mxu0 0.0
    %440 = vmatprep.subr.mxu0 0.0
    %441 = vmatpush1.msra.mxu0 0.0
    %442 = vmatprep.subr.mxu0 0.0
    %443 = vmatpush1.msra.mxu0 0.0
    %444 = vmatprep.subr.mxu0 0.0
    %445 = vmatpush1.msra.mxu0 0.0
    %446 = vmatprep.subr.mxu0 0.0
    %447 = vmatpush1.msra.mxu0 0.0
    %448 = vmatprep.subr.mxu0 0.0
    %449 = vmatpush1.msra.mxu0 0.0
    %450 = vmatprep.subr.mxu0 0.0
    %451 = vmatpush1.msra.mxu0 %v150
    %452 = vmatprep.subr.mxu0 0.0
    %453 = vmatpush1.msra.mxu0 %v149
    %454 = vmatprep.subr.mxu0 0.0
    %455 = vmatpush1.msra.mxu0 %v148
    %456 = vmatprep.subr.mxu0 0.0
    %457 = vmatpush1.msra.mxu0 %v147
    %458 = vmatprep.subr.mxu0 0.0
    %459 = vmatpush2.msra.mxu0 0.0
    %460 = vmatprep.subr.mxu0 0.0
    %461 = vmatpush2.msra.mxu0 0.0
    %462 = vmatprep.subr.mxu0 0.0
    %463 = vmatpush2.msra.mxu0 0.0
    %464 = vmatprep.subr.mxu0 0.0
    %465 = vmatpush2.msra.mxu0 0.0
    %466 = vmatprep.subr.mxu0 0.0
    %467 = vmatpush2.msra.mxu0 0.0
    %468 = vmatprep.subr.mxu0 0.0
    %469 = vmatpush2.msra.mxu0 0.0
    %470 = vmatprep.subr.mxu0 0.0
    %471 = vmatpush2.msra.mxu0 0.0
    %472 = vmatprep.subr.mxu0 0.0
    %473 = vmatpush2.msra.mxu0 0.0
    %474 = vmatprep.subr.mxu0 0.0
    %475 = vmatpush2.msra.mxu0 0.0
    %476 = vmatprep.subr.mxu0 0.0
    %477 = vmatpush2.msra.mxu0 0.0
    %478 = vmatprep.subr.mxu0 0.0
    %479 = vmatpush2.msra.mxu0 0.0
    %480 = vmatprep.subr.mxu0 0.0
    %481 = vmatpush2.msra.mxu0 0.0
    %482 = vmatprep.subr.mxu0 0.0
    %483 = vmatpush2.msra.mxu0 0.0
    %484 = vmatprep.subr.mxu0 0.0
    %485 = vmatpush2.msra.mxu0 0.0
    %486 = vmatprep.subr.mxu0 0.0
    %487 = vmatpush2.msra.mxu0 0.0
    %488 = vmatprep.subr.mxu0 0.0
    %489 = vmatpush2.msra.mxu0 0.0
    %490 = vmatprep.mubr.f32.mxu0 0.0
    %491 = vmatmul.mubr.f32.gmra.mxu0 %v424
    %v492 = vpop.f32.mrf.mxu0
    %v493 = vadd.f32 0.0, %v492
    %v494 = vpop.f32.mrf.mxu0
    %495 = vdwg.mxu0
    %v497 = vrot.slane %v493, 6
    %v498 = vrot.slane %v493, 7
    %v501 = vadd.f32 %v139, %v497
    %v502 = vadd.f32 %v144, %v498
    %v503 = vxor.u32 %v501, 2147483648
    %v504 = vxor.u32 %v502, 2147483648
    %v505 = vmul.f32 %v503, 1.442695
    %v506 = vpow.pop %v505
    %v507 = vmul.f32 %v504, 1.442695
    %v508 = vpow.pop %v507
    %v509 = vadd.f32 %v506, 1.0
    %v510 = vadd.f32 %v508, 1.0
    %v511 = vrcp.pop %v509
    %v512 = vmul.f32 1.0, %v511
    %v513 = vrcp.pop %v510
    %v514 = vmul.f32 1.0, %v513
    %v515 = vtanh.pop %v501
    %v516 = vtanh.pop %v502
    %v519 = vrot.slane %v404, 7
    %v520 = vrot.slane %v405, 7
    %v523 = vmul.f32 %v512, %v519
    %v524 = vmul.f32 %v514, %v520
    %527 = vrot.lane.b32.xlu0 %v515, 64
    %v528 = vpop.permute.xlu0 %527
    %529 = vrot.lane.b32.xlu0 %v516, 64
    %v530 = vpop.permute.xlu0 %529
    %v533 = vmul.f32 %v512, %v528
    %v534 = vmul.f32 %v514, %v530
    %537 = vrot.lane.b32.xlu0 %v533, 32
    %v538 = vpop.permute.xlu0 %537
    %539 = vrot.lane.b32.xlu0 %v534, 32
    %v540 = vpop.permute.xlu0 %539
    %v543 = vadd.f32 %v523, %v538
    %v544 = vadd.f32 %v524, %v540
    %v545 = vtanh.pop %v543
    %v546 = vtanh.pop %v544
    %549 = vrot.lane.b32.xlu0 %v545, 64
    %v550 = vpop.permute.xlu0 %549
    %551 = vrot.lane.b32.xlu0 %v546, 64
    %v552 = vpop.permute.xlu0 %551
    %v555 = vmul.f32 %v512, %v550
    %v556 = vmul.f32 %v514, %v552
    %v559 = vrot.slane %v555, 2
    %v560 = vrot.slane %v556, 1
    %v561 = vsel %vm282, %v560, %v559
    %562 = vrot.lane.b32.xlu0 %v561, 32
    %v563 = vpop.permute.xlu0 %562
    %v564 = vsel %vm151, %v563, 0
    %566 = vmatprep.subr.mxu0 0.0
    %567 = vmatpush1.msra.mxu0 0.0
    %568 = vmatprep.subr.mxu0 0.0
    %569 = vmatpush1.msra.mxu0 0.0
    %570 = vmatprep.subr.mxu0 0.0
    %571 = vmatpush1.msra.mxu0 0.0
    %572 = vmatprep.subr.mxu0 0.0
    %573 = vmatpush1.msra.mxu0 0.0
    %574 = vmatprep.subr.mxu0 0.0
    %575 = vmatpush1.msra.mxu0 0.0
    %576 = vmatprep.subr.mxu0 0.0
    %577 = vmatpush1.msra.mxu0 0.0
    %578 = vmatprep.subr.mxu0 0.0
    %579 = vmatpush1.msra.mxu0 0.0
    %580 = vmatprep.subr.mxu0 0.0
    %581 = vmatpush1.msra.mxu0 0.0
    %582 = vmatprep.subr.mxu0 0.0
    %583 = vmatpush1.msra.mxu0 0.0
    %584 = vmatprep.subr.mxu0 0.0
    %585 = vmatpush1.msra.mxu0 0.0
    %586 = vmatprep.subr.mxu0 0.0
    %587 = vmatpush1.msra.mxu0 0.0
    %588 = vmatprep.subr.mxu0 0.0
    %589 = vmatpush1.msra.mxu0 0.0
    %590 = vmatprep.subr.mxu0 0.0
    %591 = vmatpush1.msra.mxu0 %v150
    %592 = vmatprep.subr.mxu0 0.0
    %593 = vmatpush1.msra.mxu0 %v149
    %594 = vmatprep.subr.mxu0 0.0
    %595 = vmatpush1.msra.mxu0 %v148
    %596 = vmatprep.subr.mxu0 0.0
    %597 = vmatpush1.msra.mxu0 %v147
    %598 = vmatprep.subr.mxu0 0.0
    %599 = vmatpush2.msra.mxu0 0.0
    %600 = vmatprep.subr.mxu0 0.0
    %601 = vmatpush2.msra.mxu0 0.0
    %602 = vmatprep.subr.mxu0 0.0
    %603 = vmatpush2.msra.mxu0 0.0
    %604 = vmatprep.subr.mxu0 0.0
    %605 = vmatpush2.msra.mxu0 0.0
    %606 = vmatprep.subr.mxu0 0.0
    %607 = vmatpush2.msra.mxu0 0.0
    %608 = vmatprep.subr.mxu0 0.0
    %609 = vmatpush2.msra.mxu0 0.0
    %610 = vmatprep.subr.mxu0 0.0
    %611 = vmatpush2.msra.mxu0 0.0
    %612 = vmatprep.subr.mxu0 0.0
    %613 = vmatpush2.msra.mxu0 0.0
    %614 = vmatprep.subr.mxu0 0.0
    %615 = vmatpush2.msra.mxu0 0.0
    %616 = vmatprep.subr.mxu0 0.0
    %617 = vmatpush2.msra.mxu0 0.0
    %618 = vmatprep.subr.mxu0 0.0
    %619 = vmatpush2.msra.mxu0 0.0
    %620 = vmatprep.subr.mxu0 0.0
    %621 = vmatpush2.msra.mxu0 0.0
    %622 = vmatprep.subr.mxu0 0.0
    %623 = vmatpush2.msra.mxu0 0.0
    %624 = vmatprep.subr.mxu0 0.0
    %625 = vmatpush2.msra.mxu0 0.0
    %626 = vmatprep.subr.mxu0 0.0
    %627 = vmatpush2.msra.mxu0 0.0
    %628 = vmatprep.subr.mxu0 0.0
    %629 = vmatpush2.msra.mxu0 0.0
    %630 = vmatprep.mubr.f32.mxu0 0.0
    %631 = vmatmul.mubr.f32.gmra.mxu0 %v564
    %v632 = vpop.f32.mrf.mxu0
    %v633 = vadd.f32 0.0, %v632
    %v634 = vpop.f32.mrf.mxu0
    %635 = vdwg.mxu0
    %v637 = vrot.slane %v633, 5
    %v638 = vrot.slane %v633, 6
    %v641 = vadd.f32 %v139, %v637
    %v642 = vadd.f32 %v144, %v638
    %v643 = vxor.u32 %v641, 2147483648
    %v644 = vxor.u32 %v642, 2147483648
    %v645 = vmul.f32 %v643, 1.442695
    %v646 = vpow.pop %v645
    %v647 = vmul.f32 %v644, 1.442695
    %v648 = vpow.pop %v647
    %v649 = vadd.f32 %v646, 1.0
    %v650 = vadd.f32 %v648, 1.0
    %v651 = vrcp.pop %v649
    %v652 = vmul.f32 1.0, %v651
    %v653 = vrcp.pop %v650
    %v654 = vmul.f32 1.0, %v653
    %v655 = vtanh.pop %v641
    %v656 = vtanh.pop %v642
    %v659 = vrot.slane %v543, 7
    %v660 = vrot.slane %v544, 7
    %v663 = vmul.f32 %v652, %v659
    %v664 = vmul.f32 %v654, %v660
    %667 = vrot.lane.b32.xlu0 %v655, 64
    %v668 = vpop.permute.xlu0 %667
    %669 = vrot.lane.b32.xlu0 %v656, 64
    %v670 = vpop.permute.xlu0 %669
    %v673 = vmul.f32 %v652, %v668
    %v674 = vmul.f32 %v654, %v670
    %677 = vrot.lane.b32.xlu0 %v673, 32
    %v678 = vpop.permute.xlu0 %677
    %679 = vrot.lane.b32.xlu0 %v674, 32
    %v680 = vpop.permute.xlu0 %679
    %v683 = vadd.f32 %v663, %v678
    %v684 = vadd.f32 %v664, %v680
    %v685 = vtanh.pop %v683
    %v686 = vtanh.pop %v684
    %689 = vrot.lane.b32.xlu0 %v685, 64
    %v690 = vpop.permute.xlu0 %689
    %691 = vrot.lane.b32.xlu0 %v686, 64
    %v692 = vpop.permute.xlu0 %691
    %v695 = vmul.f32 %v652, %v690
    %v696 = vmul.f32 %v654, %v692
    %v699 = vrot.slane %v695, 3
    %v700 = vrot.slane %v696, 2
    %v701 = vsel %vm282, %v700, %v699
    %702 = vrot.lane.b32.xlu0 %v701, 32
    %v703 = vpop.permute.xlu0 %702
    %v704 = vsel %vm151, %v703, 0
    %706 = vmatprep.subr.mxu0 0.0
    %707 = vmatpush1.msra.mxu0 0.0
    %708 = vmatprep.subr.mxu0 0.0
    %709 = vmatpush1.msra.mxu0 0.0
    %710 = vmatprep.subr.mxu0 0.0
    %711 = vmatpush1.msra.mxu0 0.0
    %712 = vmatprep.subr.mxu0 0.0
    %713 = vmatpush1.msra.mxu0 0.0
    %714 = vmatprep.subr.mxu0 0.0
    %715 = vmatpush1.msra.mxu0 0.0
    %716 = vmatprep.subr.mxu0 0.0
    %717 = vmatpush1.msra.mxu0 0.0
    %718 = vmatprep.subr.mxu0 0.0
    %719 = vmatpush1.msra.mxu0 0.0
    %720 = vmatprep.subr.mxu0 0.0
    %721 = vmatpush1.msra.mxu0 0.0
    %722 = vmatprep.subr.mxu0 0.0
    %723 = vmatpush1.msra.mxu0 0.0
    %724 = vmatprep.subr.mxu0 0.0
    %725 = vmatpush1.msra.mxu0 0.0
    %726 = vmatprep.subr.mxu0 0.0
    %727 = vmatpush1.msra.mxu0 0.0
    %728 = vmatprep.subr.mxu0 0.0
    %729 = vmatpush1.msra.mxu0 0.0
    %730 = vmatprep.subr.mxu0 0.0
    %731 = vmatpush1.msra.mxu0 %v150
    %732 = vmatprep.subr.mxu0 0.0
    %733 = vmatpush1.msra.mxu0 %v149
    %734 = vmatprep.subr.mxu0 0.0
    %735 = vmatpush1.msra.mxu0 %v148
    %736 = vmatprep.subr.mxu0 0.0
    %737 = vmatpush1.msra.mxu0 %v147
    %738 = vmatprep.subr.mxu0 0.0
    %739 = vmatpush2.msra.mxu0 0.0
    %740 = vmatprep.subr.mxu0 0.0
    %741 = vmatpush2.msra.mxu0 0.0
    %742 = vmatprep.subr.mxu0 0.0
    %743 = vmatpush2.msra.mxu0 0.0
    %744 = vmatprep.subr.mxu0 0.0
    %745 = vmatpush2.msra.mxu0 0.0
    %746 = vmatprep.subr.mxu0 0.0
    %747 = vmatpush2.msra.mxu0 0.0
    %748 = vmatprep.subr.mxu0 0.0
    %749 = vmatpush2.msra.mxu0 0.0
    %750 = vmatprep.subr.mxu0 0.0
    %751 = vmatpush2.msra.mxu0 0.0
    %752 = vmatprep.subr.mxu0 0.0
    %753 = vmatpush2.msra.mxu0 0.0
    %754 = vmatprep.subr.mxu0 0.0
    %755 = vmatpush2.msra.mxu0 0.0
    %756 = vmatprep.subr.mxu0 0.0
    %757 = vmatpush2.msra.mxu0 0.0
    %758 = vmatprep.subr.mxu0 0.0
    %759 = vmatpush2.msra.mxu0 0.0
    %760 = vmatprep.subr.mxu0 0.0
    %761 = vmatpush2.msra.mxu0 0.0
    %762 = vmatprep.subr.mxu0 0.0
    %763 = vmatpush2.msra.mxu0 0.0
    %764 = vmatprep.subr.mxu0 0.0
    %765 = vmatpush2.msra.mxu0 0.0
    %766 = vmatprep.subr.mxu0 0.0
    %767 = vmatpush2.msra.mxu0 0.0
    %768 = vmatprep.subr.mxu0 0.0
    %769 = vmatpush2.msra.mxu0 0.0
    %770 = vmatprep.mubr.f32.mxu0 0.0
    %771 = vmatmul.mubr.f32.gmra.mxu0 %v704
    %v772 = vpop.f32.mrf.mxu0
    %v773 = vadd.f32 0.0, %v772
    %v774 = vpop.f32.mrf.mxu0
    %775 = vdwg.mxu0
    %v777 = vrot.slane %v773, 4
    %v778 = vrot.slane %v773, 5
    %v781 = vadd.f32 %v139, %v777
    %v782 = vadd.f32 %v144, %v778
    %v783 = vxor.u32 %v781, 2147483648
    %v784 = vxor.u32 %v782, 2147483648
    %v785 = vmul.f32 %v783, 1.442695
    %v786 = vpow.pop %v785
    %v787 = vmul.f32 %v784, 1.442695
    %v788 = vpow.pop %v787
    %v789 = vadd.f32 %v786, 1.0
    %v790 = vadd.f32 %v788, 1.0
    %v791 = vrcp.pop %v789
    %v792 = vmul.f32 1.0, %v791
    %v793 = vrcp.pop %v790
    %v794 = vmul.f32 1.0, %v793
    %v795 = vtanh.pop %v781
    %v796 = vtanh.pop %v782
    %v799 = vrot.slane %v683, 7
    %v800 = vrot.slane %v684, 7
    %v803 = vmul.f32 %v792, %v799
    %v804 = vmul.f32 %v794, %v800
    %807 = vrot.lane.b32.xlu0 %v795, 64
    %v808 = vpop.permute.xlu0 %807
    %809 = vrot.lane.b32.xlu0 %v796, 64
    %v810 = vpop.permute.xlu0 %809
    %v813 = vmul.f32 %v792, %v808
    %v814 = vmul.f32 %v794, %v810
    %817 = vrot.lane.b32.xlu0 %v813, 32
    %v818 = vpop.permute.xlu0 %817
    %819 = vrot.lane.b32.xlu0 %v814, 32
    %v820 = vpop.permute.xlu0 %819
    %v823 = vadd.f32 %v803, %v818
    %v824 = vadd.f32 %v804, %v820
    %v825 = vtanh.pop %v823
    %v826 = vtanh.pop %v824
    %829 = vrot.lane.b32.xlu0 %v825, 64
    %v830 = vpop.permute.xlu0 %829
    %831 = vrot.lane.b32.xlu0 %v826, 64
    %v832 = vpop.permute.xlu0 %831
    %v835 = vmul.f32 %v792, %v830
    %v836 = vmul.f32 %v794, %v832
    %v839 = vrot.slane %v835, 4
    %v840 = vrot.slane %v836, 3
    %v841 = vsel %vm282, %v840, %v839
    %842 = vrot.lane.b32.xlu0 %v841, 32
    %v843 = vpop.permute.xlu0 %842
    %v844 = vsel %vm151, %v843, 0
    %846 = vmatprep.subr.mxu0 0.0
    %847 = vmatpush1.msra.mxu0 0.0
    %848 = vmatprep.subr.mxu0 0.0
    %849 = vmatpush1.msra.mxu0 0.0
    %850 = vmatprep.subr.mxu0 0.0
    %851 = vmatpush1.msra.mxu0 0.0
    %852 = vmatprep.subr.mxu0 0.0
    %853 = vmatpush1.msra.mxu0 0.0
    %854 = vmatprep.subr.mxu0 0.0
    %855 = vmatpush1.msra.mxu0 0.0
    %856 = vmatprep.subr.mxu0 0.0
    %857 = vmatpush1.msra.mxu0 0.0
    %858 = vmatprep.subr.mxu0 0.0
    %859 = vmatpush1.msra.mxu0 0.0
    %860 = vmatprep.subr.mxu0 0.0
    %861 = vmatpush1.msra.mxu0 0.0
    %862 = vmatprep.subr.mxu0 0.0
    %863 = vmatpush1.msra.mxu0 0.0
    %864 = vmatprep.subr.mxu0 0.0
    %865 = vmatpush1.msra.mxu0 0.0
    %866 = vmatprep.subr.mxu0 0.0
    %867 = vmatpush1.msra.mxu0 0.0
    %868 = vmatprep.subr.mxu0 0.0
    %869 = vmatpush1.msra.mxu0 0.0
    %870 = vmatprep.subr.mxu0 0.0
    %871 = vmatpush1.msra.mxu0 %v150
    %872 = vmatprep.subr.mxu0 0.0
    %873 = vmatpush1.msra.mxu0 %v149
    %874 = vmatprep.subr.mxu0 0.0
    %875 = vmatpush1.msra.mxu0 %v148
    %876 = vmatprep.subr.mxu0 0.0
    %877 = vmatpush1.msra.mxu0 %v147
    %878 = vmatprep.subr.mxu0 0.0
    %879 = vmatpush2.msra.mxu0 0.0
    %880 = vmatprep.subr.mxu0 0.0
    %881 = vmatpush2.msra.mxu0 0.0
    %882 = vmatprep.subr.mxu0 0.0
    %883 = vmatpush2.msra.mxu0 0.0
    %884 = vmatprep.subr.mxu0 0.0
    %885 = vmatpush2.msra.mxu0 0.0
    %886 = vmatprep.subr.mxu0 0.0
    %887 = vmatpush2.msra.mxu0 0.0
    %888 = vmatprep.subr.mxu0 0.0
    %889 = vmatpush2.msra.mxu0 0.0
    %890 = vmatprep.subr.mxu0 0.0
    %891 = vmatpush2.msra.mxu0 0.0
    %892 = vmatprep.subr.mxu0 0.0
    %893 = vmatpush2.msra.mxu0 0.0
    %894 = vmatprep.subr.mxu0 0.0
    %895 = vmatpush2.msra.mxu0 0.0
    %896 = vmatprep.subr.mxu0 0.0
    %897 = vmatpush2.msra.mxu0 0.0
    %898 = vmatprep.subr.mxu0 0.0
    %899 = vmatpush2.msra.mxu0 0.0
    %900 = vmatprep.subr.mxu0 0.0
    %901 = vmatpush2.msra.mxu0 0.0
    %902 = vmatprep.subr.mxu0 0.0
    %903 = vmatpush2.msra.mxu0 0.0
    %904 = vmatprep.subr.mxu0 0.0
    %905 = vmatpush2.msra.mxu0 0.0
    %906 = vmatprep.subr.mxu0 0.0
    %907 = vmatpush2.msra.mxu0 0.0
    %908 = vmatprep.subr.mxu0 0.0
    %909 = vmatpush2.msra.mxu0 0.0
    %910 = vmatprep.mubr.f32.mxu0 0.0
    %911 = vmatmul.mubr.f32.gmra.mxu0 %v844
    %v912 = vpop.f32.mrf.mxu0
    %v913 = vadd.f32 0.0, %v912
    %v914 = vpop.f32.mrf.mxu0
    %915 = vdwg.mxu0
    %v917 = vrot.slane %v913, 3
    %v918 = vrot.slane %v913, 4
    %v921 = vadd.f32 %v139, %v917
    %v922 = vadd.f32 %v144, %v918
    %v923 = vxor.u32 %v921, 2147483648
    %v924 = vxor.u32 %v922, 2147483648
    %v925 = vmul.f32 %v923, 1.442695
    %v926 = vpow.pop %v925
    %v927 = vmul.f32 %v924, 1.442695
    %v928 = vpow.pop %v927
    %v929 = vadd.f32 %v926, 1.0
    %v930 = vadd.f32 %v928, 1.0
    %v931 = vrcp.pop %v929
    %v932 = vmul.f32 1.0, %v931
    %v933 = vrcp.pop %v930
    %v934 = vmul.f32 1.0, %v933
    %v935 = vtanh.pop %v921
    %v936 = vtanh.pop %v922
    %v939 = vrot.slane %v823, 7
    %v940 = vrot.slane %v824, 7
    %v943 = vmul.f32 %v932, %v939
    %v944 = vmul.f32 %v934, %v940
    %947 = vrot.lane.b32.xlu0 %v935, 64
    %v948 = vpop.permute.xlu0 %947
    %949 = vrot.lane.b32.xlu0 %v936, 64
    %v950 = vpop.permute.xlu0 %949
    %v953 = vmul.f32 %v932, %v948
    %v954 = vmul.f32 %v934, %v950
    %957 = vrot.lane.b32.xlu0 %v953, 32
    %v958 = vpop.permute.xlu0 %957
    %959 = vrot.lane.b32.xlu0 %v954, 32
    %v960 = vpop.permute.xlu0 %959
    %v963 = vadd.f32 %v943, %v958
    %v964 = vadd.f32 %v944, %v960
    %v965 = vtanh.pop %v963
    %v966 = vtanh.pop %v964
    %969 = vrot.lane.b32.xlu0 %v965, 64
    %v970 = vpop.permute.xlu0 %969
    %971 = vrot.lane.b32.xlu0 %v966, 64
    %v972 = vpop.permute.xlu0 %971
    %v975 = vmul.f32 %v932, %v970
    %v976 = vmul.f32 %v934, %v972
    %v979 = vrot.slane %v975, 5
    %v980 = vrot.slane %v976, 4
    %v981 = vsel %vm282, %v980, %v979
    %982 = vrot.lane.b32.xlu0 %v981, 32
    %v983 = vpop.permute.xlu0 %982
    %v984 = vsel %vm151, %v983, 0
    %986 = vmatprep.subr.mxu0 0.0
    %987 = vmatpush1.msra.mxu0 0.0
    %988 = vmatprep.subr.mxu0 0.0
    %989 = vmatpush1.msra.mxu0 0.0
    %990 = vmatprep.subr.mxu0 0.0
    %991 = vmatpush1.msra.mxu0 0.0
    %992 = vmatprep.subr.mxu0 0.0
    %993 = vmatpush1.msra.mxu0 0.0
    %994 = vmatprep.subr.mxu0 0.0
    %995 = vmatpush1.msra.mxu0 0.0
    %996 = vmatprep.subr.mxu0 0.0
    %997 = vmatpush1.msra.mxu0 0.0
    %998 = vmatprep.subr.mxu0 0.0
    %999 = vmatpush1.msra.mxu0 0.0
    %1000 = vmatprep.subr.mxu0 0.0
    %1001 = vmatpush1.msra.mxu0 0.0
    %1002 = vmatprep.subr.mxu0 0.0
    %1003 = vmatpush1.msra.mxu0 0.0
    %1004 = vmatprep.subr.mxu0 0.0
    %1005 = vmatpush1.msra.mxu0 0.0
    %1006 = vmatprep.subr.mxu0 0.0
    %1007 = vmatpush1.msra.mxu0 0.0
    %1008 = vmatprep.subr.mxu0 0.0
    %1009 = vmatpush1.msra.mxu0 0.0
    %1010 = vmatprep.subr.mxu0 0.0
    %1011 = vmatpush1.msra.mxu0 %v150
    %1012 = vmatprep.subr.mxu0 0.0
    %1013 = vmatpush1.msra.mxu0 %v149
    %1014 = vmatprep.subr.mxu0 0.0
    %1015 = vmatpush1.msra.mxu0 %v148
    %1016 = vmatprep.subr.mxu0 0.0
    %1017 = vmatpush1.msra.mxu0 %v147
    %1018 = vmatprep.subr.mxu0 0.0
    %1019 = vmatpush2.msra.mxu0 0.0
    %1020 = vmatprep.subr.mxu0 0.0
    %1021 = vmatpush2.msra.mxu0 0.0
    %1022 = vmatprep.subr.mxu0 0.0
    %1023 = vmatpush2.msra.mxu0 0.0
    %1024 = vmatprep.subr.mxu0 0.0
    %1025 = vmatpush2.msra.mxu0 0.0
    %1026 = vmatprep.subr.mxu0 0.0
    %1027 = vmatpush2.msra.mxu0 0.0
    %1028 = vmatprep.subr.mxu0 0.0
    %1029 = vmatpush2.msra.mxu0 0.0
    %1030 = vmatprep.subr.mxu0 0.0
    %1031 = vmatpush2.msra.mxu0 0.0
    %1032 = vmatprep.subr.mxu0 0.0
    %1033 = vmatpush2.msra.mxu0 0.0
    %1034 = vmatprep.subr.mxu0 0.0
    %1035 = vmatpush2.msra.mxu0 0.0
    %1036 = vmatprep.subr.mxu0 0.0
    %1037 = vmatpush2.msra.mxu0 0.0
    %1038 = vmatprep.subr.mxu0 0.0
    %1039 = vmatpush2.msra.mxu0 0.0
    %1040 = vmatprep.subr.mxu0 0.0
    %1041 = vmatpush2.msra.mxu0 0.0
    %1042 = vmatprep.subr.mxu0 0.0
    %1043 = vmatpush2.msra.mxu0 0.0
    %1044 = vmatprep.subr.mxu0 0.0
    %1045 = vmatpush2.msra.mxu0 0.0
    %1046 = vmatprep.subr.mxu0 0.0
    %1047 = vmatpush2.msra.mxu0 0.0
    %1048 = vmatprep.subr.mxu0 0.0
    %1049 = vmatpush2.msra.mxu0 0.0
    %1050 = vmatprep.mubr.f32.mxu0 0.0
    %1051 = vmatmul.mubr.f32.gmra.mxu0 %v984
    %v1052 = vpop.f32.mrf.mxu0
    %v1053 = vadd.f32 0.0, %v1052
    %v1054 = vpop.f32.mrf.mxu0
    %1055 = vdwg.mxu0
    %v1057 = vrot.slane %v1053, 2
    %v1058 = vrot.slane %v1053, 3
    %v1061 = vadd.f32 %v139, %v1057
    %v1062 = vadd.f32 %v144, %v1058
    %v1063 = vxor.u32 %v1061, 2147483648
    %v1064 = vxor.u32 %v1062, 2147483648
    %v1065 = vmul.f32 %v1063, 1.442695
    %v1066 = vpow.pop %v1065
    %v1067 = vmul.f32 %v1064, 1.442695
    %v1068 = vpow.pop %v1067
    %v1069 = vadd.f32 %v1066, 1.0
    %v1070 = vadd.f32 %v1068, 1.0
    %v1071 = vrcp.pop %v1069
    %v1072 = vmul.f32 1.0, %v1071
    %v1073 = vrcp.pop %v1070
    %v1074 = vmul.f32 1.0, %v1073
    %v1075 = vtanh.pop %v1061
    %v1076 = vtanh.pop %v1062
    %v1079 = vrot.slane %v963, 7
    %v1080 = vrot.slane %v964, 7
    %v1083 = vmul.f32 %v1072, %v1079
    %v1084 = vmul.f32 %v1074, %v1080
    %1087 = vrot.lane.b32.xlu0 %v1075, 64
    %v1088 = vpop.permute.xlu0 %1087
    %1089 = vrot.lane.b32.xlu0 %v1076, 64
    %v1090 = vpop.permute.xlu0 %1089
    %v1093 = vmul.f32 %v1072, %v1088
    %v1094 = vmul.f32 %v1074, %v1090
    %1097 = vrot.lane.b32.xlu0 %v1093, 32
    %v1098 = vpop.permute.xlu0 %1097
    %1099 = vrot.lane.b32.xlu0 %v1094, 32
    %v1100 = vpop.permute.xlu0 %1099
    %v1103 = vadd.f32 %v1083, %v1098
    %v1104 = vadd.f32 %v1084, %v1100
    %v1105 = vtanh.pop %v1103
    %v1106 = vtanh.pop %v1104
    %1109 = vrot.lane.b32.xlu0 %v1105, 64
    %v1110 = vpop.permute.xlu0 %1109
    %1111 = vrot.lane.b32.xlu0 %v1106, 64
    %v1112 = vpop.permute.xlu0 %1111
    %v1115 = vmul.f32 %v1072, %v1110
    %v1116 = vmul.f32 %v1074, %v1112
    %v1119 = vrot.slane %v1115, 6
    %v1120 = vrot.slane %v1116, 5
    %v1121 = vsel %vm282, %v1120, %v1119
    %1122 = vrot.lane.b32.xlu0 %v1121, 32
    %v1123 = vpop.permute.xlu0 %1122
    %v1124 = vsel %vm151, %v1123, 0
    %1126 = vmatprep.subr.mxu0 0.0
    %1127 = vmatpush1.msra.mxu0 0.0
    %1128 = vmatprep.subr.mxu0 0.0
    %1129 = vmatpush1.msra.mxu0 0.0
    %1130 = vmatprep.subr.mxu0 0.0
    %1131 = vmatpush1.msra.mxu0 0.0
    %1132 = vmatprep.subr.mxu0 0.0
    %1133 = vmatpush1.msra.mxu0 0.0
    %1134 = vmatprep.subr.mxu0 0.0
    %1135 = vmatpush1.msra.mxu0 0.0
    %1136 = vmatprep.subr.mxu0 0.0
    %1137 = vmatpush1.msra.mxu0 0.0
    %1138 = vmatprep.subr.mxu0 0.0
    %1139 = vmatpush1.msra.mxu0 0.0
    %1140 = vmatprep.subr.mxu0 0.0
    %1141 = vmatpush1.msra.mxu0 0.0
    %1142 = vmatprep.subr.mxu0 0.0
    %1143 = vmatpush1.msra.mxu0 0.0
    %1144 = vmatprep.subr.mxu0 0.0
    %1145 = vmatpush1.msra.mxu0 0.0
    %1146 = vmatprep.subr.mxu0 0.0
    %1147 = vmatpush1.msra.mxu0 0.0
    %1148 = vmatprep.subr.mxu0 0.0
    %1149 = vmatpush1.msra.mxu0 0.0
    %1150 = vmatprep.subr.mxu0 0.0
    %1151 = vmatpush1.msra.mxu0 %v150
    %1152 = vmatprep.subr.mxu0 0.0
    %1153 = vmatpush1.msra.mxu0 %v149
    %1154 = vmatprep.subr.mxu0 0.0
    %1155 = vmatpush1.msra.mxu0 %v148
    %1156 = vmatprep.subr.mxu0 0.0
    %1157 = vmatpush1.msra.mxu0 %v147
    %1158 = vmatprep.subr.mxu0 0.0
    %1159 = vmatpush2.msra.mxu0 0.0
    %1160 = vmatprep.subr.mxu0 0.0
    %1161 = vmatpush2.msra.mxu0 0.0
    %1162 = vmatprep.subr.mxu0 0.0
    %1163 = vmatpush2.msra.mxu0 0.0
    %1164 = vmatprep.subr.mxu0 0.0
    %1165 = vmatpush2.msra.mxu0 0.0
    %1166 = vmatprep.subr.mxu0 0.0
    %1167 = vmatpush2.msra.mxu0 0.0
    %1168 = vmatprep.subr.mxu0 0.0
    %1169 = vmatpush2.msra.mxu0 0.0
    %1170 = vmatprep.subr.mxu0 0.0
    %1171 = vmatpush2.msra.mxu0 0.0
    %1172 = vmatprep.subr.mxu0 0.0
    %1173 = vmatpush2.msra.mxu0 0.0
    %1174 = vmatprep.subr.mxu0 0.0
    %1175 = vmatpush2.msra.mxu0 0.0
    %1176 = vmatprep.subr.mxu0 0.0
    %1177 = vmatpush2.msra.mxu0 0.0
    %1178 = vmatprep.subr.mxu0 0.0
    %1179 = vmatpush2.msra.mxu0 0.0
    %1180 = vmatprep.subr.mxu0 0.0
    %1181 = vmatpush2.msra.mxu0 0.0
    %1182 = vmatprep.subr.mxu0 0.0
    %1183 = vmatpush2.msra.mxu0 0.0
    %1184 = vmatprep.subr.mxu0 0.0
    %1185 = vmatpush2.msra.mxu0 0.0
    %1186 = vmatprep.subr.mxu0 0.0
    %1187 = vmatpush2.msra.mxu0 0.0
    %1188 = vmatprep.subr.mxu0 0.0
    %1189 = vmatpush2.msra.mxu0 0.0
    %1190 = vmatprep.mubr.f32.mxu0 0.0
    %1191 = vmatmul.mubr.f32.gmra.mxu0 %v1124
    %v1192 = vpop.f32.mrf.mxu0
    %v1193 = vadd.f32 0.0, %v1192
    %v1194 = vpop.f32.mrf.mxu0
    %1195 = vdwg.mxu0
    %v1197 = vrot.slane %v1193, 1
    %v1198 = vrot.slane %v1193, 2
    %v1201 = vadd.f32 %v139, %v1197
    %v1202 = vadd.f32 %v144, %v1198
    %v1203 = vxor.u32 %v1201, 2147483648
    %v1204 = vxor.u32 %v1202, 2147483648
    %v1205 = vmul.f32 %v1203, 1.442695
    %v1206 = vpow.pop %v1205
    %v1207 = vmul.f32 %v1204, 1.442695
    %v1208 = vpow.pop %v1207
    %v1209 = vadd.f32 %v1206, 1.0
    %v1210 = vadd.f32 %v1208, 1.0
    %v1211 = vrcp.pop %v1209
    %v1212 = vmul.f32 1.0, %v1211
    %v1213 = vrcp.pop %v1210
    %v1214 = vmul.f32 1.0, %v1213
    %v1215 = vtanh.pop %v1201
    %v1216 = vtanh.pop %v1202
    %v1219 = vrot.slane %v1103, 7
    %v1220 = vrot.slane %v1104, 7
    %v1223 = vmul.f32 %v1212, %v1219
    %v1224 = vmul.f32 %v1214, %v1220
    %1227 = vrot.lane.b32.xlu0 %v1215, 64
    %v1228 = vpop.permute.xlu0 %1227
    %1229 = vrot.lane.b32.xlu0 %v1216, 64
    %v1230 = vpop.permute.xlu0 %1229
    %v1233 = vmul.f32 %v1212, %v1228
    %v1234 = vmul.f32 %v1214, %v1230
    %1237 = vrot.lane.b32.xlu0 %v1233, 32
    %v1238 = vpop.permute.xlu0 %1237
    %1239 = vrot.lane.b32.xlu0 %v1234, 32
    %v1240 = vpop.permute.xlu0 %1239
    %v1243 = vadd.f32 %v1223, %v1238
    %v1244 = vadd.f32 %v1224, %v1240
    %v1245 = vtanh.pop %v1243
    %v1246 = vtanh.pop %v1244
    %1249 = vrot.lane.b32.xlu0 %v1245, 64
    %v1250 = vpop.permute.xlu0 %1249
    %1251 = vrot.lane.b32.xlu0 %v1246, 64
    %v1252 = vpop.permute.xlu0 %1251
    %v1255 = vmul.f32 %v1212, %v1250
    %v1256 = vmul.f32 %v1214, %v1252
    %v1259 = vrot.slane %v1256, 7
    %1260 = vrot.lane.b32.xlu0 %v1255, 32
    %v1261 = vpop.permute.xlu0 %1260
    %1262 = vrot.lane.b32.xlu0 %v1259, 32
    %v1263 = vpop.permute.xlu0 %1262
    %vm1266 = vcmask 261127
    %1267 = vst.msk [vmem:[#allocation7 - $0x7] sm:$0x80] %vm1266, %v1261
    %vm1268 = vcmask 253952
    %1269 = vst.msk [vmem:[#allocation7 + $0x1] sm:$0x1] %vm1268, %v1263
    %v1272 = vrot.slane %v1244, 7
    %1273 = vrot.lane.b32.xlu0 %v1243, 96
    %v1274 = vpop.permute.xlu0 %1273
    %1275 = vrot.lane.b32.xlu0 %v1272, 96
    %v1276 = vpop.permute.xlu0 %1275
    %1279 = vst.msk [vmem:[#allocation8 - $0x7] sm:$0x80] %vm1266, %v1274
    %1280 = vst.msk [vmem:[#allocation8 + $0x1] sm:$0x1] %vm1268, %v1276
    %v1281 = vrot.slane %v417, 1
    %v1282 = vrot.slane %v556, 2
    %v1283 = vrot.slane %v696, 3
    %v1284 = vrot.slane %v836, 4
    %v1285 = vrot.slane %v976, 5
    %v1286 = vrot.slane %v1116, 6
    %v1287 = vrot.slane %v1255, 7
    %v1288 = vld [vmem:[%s4] sm:$0xff]
    %v1289 = vld [vmem:[%s4 + $0x8] sm:$0xff]
    %v1290 = vld [vmem:[%s4 + $0x10] sm:$0xff]
    %v1291 = vld [vmem:[%s4 + $0x18] sm:$0xff]
    %v1292 = vld [vmem:[#allocation5] sm:$0x1]
    %v1294 = vlaneseq
    %v1295 = vshrl.u32 %v1294, 7
    %v1296 = vsub.s32 0, %v1295
    %v1297 = vrot.slane %v1292, %v1296
    %v1299 = vrot.slane %v420, 6
    %vm1300 = vcmask 1042434
    %v1301 = vsel %vm1300, %v1299, %v283
    %v1302 = vrot.slane %v1281, 5
    %vm1303 = vcmask 1043459
    %v1304 = vsel %vm1303, %v1302, %v1301
    %v1305 = vrot.slane %v559, 4
    %vm1306 = vcmask 1044484
    %v1307 = vsel %vm1306, %v1305, %v1304
    %v1308 = vrot.slane %v1282, 3
    %vm1309 = vcmask 1045509
    %v1310 = vsel %vm1309, %v1308, %v1307
    %v1311 = vrot.slane %v699, 2
    %vm1312 = vcmask 1046534
    %v1313 = vsel %vm1312, %v1311, %v1310
    %v1314 = vrot.slane %v1283, 1
    %vm1315 = vcmask 1047559
    %v1316 = vsel %vm1315, %v1314, %v1313
    %v1317 = vrot.slane %v1284, 7
    %v1318 = vsel %vm282, %v1317, %v839
    %v1319 = vrot.slane %v979, 6
    %v1320 = vsel %vm1300, %v1319, %v1318
    %v1321 = vrot.slane %v1285, 5
    %v1322 = vsel %vm1303, %v1321, %v1320
    %v1323 = vrot.slane %v1119, 4
    %v1324 = vsel %vm1306, %v1323, %v1322
    %v1325 = vrot.slane %v1286, 3
    %v1326 = vsel %vm1309, %v1325, %v1324
    %v1327 = vrot.slane %v1287, 2
    %v1328 = vsel %vm1312, %v1327, %v1326
    %v1329 = vrot.slane %v1259, 1
    %v1330 = vsel %vm1315, %v1329, %v1328
    %1331 = vrot.lane.b32.xlu0 %v1316, 32
    %v1332 = vpop.permute.xlu0 %1331
    %1333 = vrot.lane.b32.xlu0 %v1330, 32
    %v1334 = vpop.permute.xlu0 %1333
    %v1335 = vsel %vm151, %v1332, 0
    %v1337 = vsel %vm151, %v1334, 0
    %1339 = vmatprep.subr.mxu0 0.0
    %1340 = vmatpush1.msra.mxu0 0.0
    %1341 = vmatprep.subr.mxu0 0.0
    %1342 = vmatpush1.msra.mxu0 0.0
    %1343 = vmatprep.subr.mxu0 0.0
    %1344 = vmatpush1.msra.mxu0 0.0
    %1345 = vmatprep.subr.mxu0 0.0
    %1346 = vmatpush1.msra.mxu0 0.0
    %1347 = vmatprep.subr.mxu0 0.0
    %1348 = vmatpush1.msra.mxu0 0.0
    %1349 = vmatprep.subr.mxu0 0.0
    %1350 = vmatpush1.msra.mxu0 0.0
    %1351 = vmatprep.subr.mxu0 0.0
    %1352 = vmatpush1.msra.mxu0 0.0
    %1353 = vmatprep.subr.mxu0 0.0
    %1354 = vmatpush1.msra.mxu0 0.0
    %1355 = vmatprep.subr.mxu0 0.0
    %1356 = vmatpush1.msra.mxu0 0.0
    %1357 = vmatprep.subr.mxu0 0.0
    %1358 = vmatpush1.msra.mxu0 0.0
    %1359 = vmatprep.subr.mxu0 0.0
    %1360 = vmatpush1.msra.mxu0 0.0
    %1361 = vmatprep.subr.mxu0 0.0
    %1362 = vmatpush1.msra.mxu0 0.0
    %1363 = vmatprep.subr.mxu0 0.0
    %1364 = vmatpush1.msra.mxu0 %v1291
    %1365 = vmatprep.subr.mxu0 0.0
    %1366 = vmatpush1.msra.mxu0 %v1290
    %1367 = vmatprep.subr.mxu0 0.0
    %1368 = vmatpush1.msra.mxu0 %v1289
    %1369 = vmatprep.subr.mxu0 0.0
    %1370 = vmatpush1.msra.mxu0 %v1288
    %1371 = vmatprep.subr.mxu0 0.0
    %1372 = vmatpush2.msra.mxu0 0.0
    %1373 = vmatprep.subr.mxu0 0.0
    %1374 = vmatpush2.msra.mxu0 0.0
    %1375 = vmatprep.subr.mxu0 0.0
    %1376 = vmatpush2.msra.mxu0 0.0
    %1377 = vmatprep.subr.mxu0 0.0
    %1378 = vmatpush2.msra.mxu0 0.0
    %1379 = vmatprep.subr.mxu0 0.0
    %1380 = vmatpush2.msra.mxu0 0.0
    %1381 = vmatprep.subr.mxu0 0.0
    %1382 = vmatpush2.msra.mxu0 0.0
    %1383 = vmatprep.subr.mxu0 0.0
    %1384 = vmatpush2.msra.mxu0 0.0
    %1385 = vmatprep.subr.mxu0 0.0
    %1386 = vmatpush2.msra.mxu0 0.0
    %1387 = vmatprep.subr.mxu0 0.0
    %1388 = vmatpush2.msra.mxu0 0.0
    %1389 = vmatprep.subr.mxu0 0.0
    %1390 = vmatpush2.msra.mxu0 0.0
    %1391 = vmatprep.subr.mxu0 0.0
    %1392 = vmatpush2.msra.mxu0 0.0
    %1393 = vmatprep.subr.mxu0 0.0
    %1394 = vmatpush2.msra.mxu0 0.0
    %1395 = vmatprep.subr.mxu0 0.0
    %1396 = vmatpush2.msra.mxu0 0.0
    %1397 = vmatprep.subr.mxu0 0.0
    %1398 = vmatpush2.msra.mxu0 0.0
    %1399 = vmatprep.subr.mxu0 0.0
    %1400 = vmatpush2.msra.mxu0 0.0
    %1401 = vmatprep.subr.mxu0 0.0
    %1402 = vmatpush2.msra.mxu0 0.0
    %1403 = vmatprep.mubr.f32.mxu0 0.0
    %1404 = vmatmul.mubr.f32.gmra.mxu0 %v1335
    %v1405 = vpop.f32.mrf.mxu0
    %v1406 = vadd.f32 %v1297, %v1405
    %v1407 = vpop.f32.mrf.mxu0
    %1408 = vmatprep.mubr.f32.mxu0 0.0
    %1409 = vmatmul.mubr.f32.gmra.mxu0 %v1337
    %v1410 = vpop.f32.mrf.mxu0
    %v1411 = vadd.f32 %v1297, %v1410
    %v1412 = vpop.f32.mrf.mxu0
    %1413 = vdwg.mxu0
    %v1416 = vcombine.high %v1406, %v1406
    %v1418 = vunpack.c.l.s4 1983009808
    %v1419 = vunpack.c.0.s8 %v1418
    %v1420 = vlaneseq
    %v1421 = vshrl.u32 %v1420, 7
    %v1422 = vsub.s32 %v1419, %v1421
    %v1423 = vrot.slane %v1406, %v1422
    %v1425 = vunpack.c.l.s4 1983009808
    %v1426 = vunpack.c.0.s8 %v1425
    %v1427 = vlaneseq
    %v1428 = vshrl.u32 %v1427, 7
    %v1429 = vsub.s32 %v1426, %v1428
    %v1430 = vrot.slane %v1416, %v1429
    %v1431 = vcombine.high %v1423, %v1423
    %v1432 = vcombine.high %v1430, %v1430
    %v1433 = vcombine.high %v1411, %v1411
    %v1435 = vunpack.c.l.s4 1983009808
    %v1436 = vunpack.c.0.s8 %v1435
    %v1437 = vlaneseq
    %v1438 = vshrl.u32 %v1437, 7
    %v1439 = vsub.s32 %v1436, %v1438
    %v1440 = vrot.slane %v1411, %v1439
    %v1442 = vunpack.c.l.s4 1983009808
    %v1443 = vunpack.c.0.s8 %v1442
    %v1444 = vlaneseq
    %v1445 = vshrl.u32 %v1444, 7
    %v1446 = vsub.s32 %v1443, %v1445
    %v1447 = vrot.slane %v1433, %v1446
    %v1448 = vcombine.high %v1440, %v1440
    %v1449 = vcombine.high %v1447, %v1447
    %vm1458 = vcmask 58368
    %1459 = vst.msk [vmem:[%s6] sm:$0x3] %vm1458, %v1423
    %1460 = vst.msk [vmem:[%s6 + $0x2] sm:$0x3] %vm1458, %v1431
    %1461 = vst.msk [vmem:[%s6 + $0x4] sm:$0x3] %vm1458, %v1430
    %1462 = vst.msk [vmem:[%s6 + $0x6] sm:$0x3] %vm1458, %v1432
    %1463 = vst.msk [vmem:[%s6 + $0x8] sm:$0x3] %vm1458, %v1440
    %1464 = vst.msk [vmem:[%s6 + $0xa] sm:$0x3] %vm1458, %v1448
    %1465 = vst.msk [vmem:[%s6 + $0xc] sm:$0x3] %vm1458, %v1447
    %1466 = vst.msk [vmem:[%s6 + $0xe] sm:$0x3] %vm1458, %v1449
    // Predicated region
    $region34: #{goalnet_forward.1} parent=1 // pred_check
      _
    $region35: #{goalnet_forward.1} parent=1 // pred_check_branch
      %1468 = sbr.rel (0) target = $region37
    $region36: #{goalnet_forward.1} parent=1 // pred_region
      _
    $region37: #{goalnet_forward.1} parent=1 // pred_fallthru
      _
    // Predicated region
    $region38: #{goalnet_forward.1} parent=1 // pred_check
      _
    $region39: #{goalnet_forward.1} parent=1 // pred_check_branch
      %1470 = sbr.rel (0) target = $region41
    $region40: #{goalnet_forward.1} parent=1 // pred_region
      %s1472 = ssub.s32 32, 32
      %1473 = vsyncadd [#allocation4], %s1472
      %s1475 = sshll.u32 [#allocation7], 4
      %s1476 = int_to_ptr.vmem [resolvable:$true] %s1475
      %1478 = dma.vmem_to_hbm [thread:$0]  %s1476, 32, %s7, [#allocation4]
    $region41: #{goalnet_forward.1} parent=1 // pred_fallthru
      _
    // Predicated region
    $region42: #{goalnet_forward.1} parent=1 // pred_check
      _
    $region43: #{goalnet_forward.1} parent=1 // pred_check_branch
      %1480 = sbr.rel (0) target = $region45
    $region44: #{goalnet_forward.1} parent=1 // pred_region
      %s1482 = ssub.s32 32, 32
      %1483 = vsyncadd [#allocation9], %s1482
      %s1485 = sshll.u32 [#allocation8], 4
      %s1486 = int_to_ptr.vmem [resolvable:$true] %s1485
      %1488 = dma.vmem_to_hbm [thread:$0]  %s1486, 32, %s8, [#allocation9]
    $region45: #{goalnet_forward.1} parent=1 // pred_fallthru
      _
    // Predicated region
    $region46: #{goalnet_forward.1} parent=1 // pred_check
      _
    $region47: #{goalnet_forward.1} parent=1 // pred_check_branch
      %1490 = sbr.rel (0) target = $region49
    $region48: #{goalnet_forward.1} parent=1 // pred_region
      _
    $region49: #{goalnet_forward.1} parent=1 // pred_fallthru
      _
    // Predicated region
    $region50: #{goalnet_forward.1} parent=1 // pred_check
      _
    $region51: #{goalnet_forward.1} parent=1 // pred_check_branch
      %1492 = sbr.rel (0) target = $region53
    $region52: #{goalnet_forward.1} parent=1 // pred_region
      %1493 = dma.done [#allocation4], 32
    $region53: #{goalnet_forward.1} parent=1 // pred_fallthru
      _
    // Predicated region
    $region54: #{goalnet_forward.1} parent=1 // pred_check
      _
    $region55: #{goalnet_forward.1} parent=1 // pred_check_branch
      %1495 = sbr.rel (0) target = $region57
    $region56: #{goalnet_forward.1} parent=1 // pred_region
      %1496 = dma.done [#allocation9], 32
    $region57: #{goalnet_forward.1} parent=1 // pred_fallthru
      _
    %1497 = vsyncpa [#allocation3], 1
    %1498 = vsyncpa [#allocation6], 1
    %1499 = vsyncpa [#allocation4], 1
    %1500 = vsyncpa [#allocation9], 1

</llo_original>
